<compile_context>
chip_gen: v7x
topology: tpu7x:2x2x1
jax: 0.10.0
libtpu: 0.0.40
codegen_flags: <defaults>
</compile_context>

<pallas_src>
import functools

import jax
import jax.numpy as jnp
from jax.experimental import pallas as pl
from jax.experimental.pallas import tpu as pltpu


def _attention_kernel(x_ref, wqkv_ref, wout_ref, bout_ref, o_ref, *,
                      groups, n, d, heads, dim_head, scale, compute_dtype):
    inner = heads * dim_head
    m = groups * n                                     # rows in this block

    x = x_ref[...].astype(compute_dtype)               # (m, d)
    wqkv = wqkv_ref[...].astype(compute_dtype)         # (d, 3*inner)
    wout = wout_ref[...].astype(compute_dtype)         # (inner, d)

    # One large QKV projection for all groups in the block (M = groups*n rows).
    qkv = jnp.dot(x, wqkv, preferred_element_type=jnp.float32)   # (m, 3*inner) f32

    y = jnp.zeros((m, d), jnp.float32)
    for h in range(heads):
        lo = h * dim_head
        hi = lo + dim_head
        # Fold the attention scale into q (touches m*dim_head elems, not n*n).
        q = (qkv[:, lo:hi] * scale).reshape(groups, n, dim_head)
        k = qkv[:, inner + lo:inner + hi].reshape(groups, n, dim_head)
        v = qkv[:, 2 * inner + lo:2 * inner + hi].reshape(groups, n, dim_head)

        # Group-batched scores + softmax (f32).
        s = jnp.einsum('gne,gme->gnm',
                       q.astype(compute_dtype), k.astype(compute_dtype),
                       preferred_element_type=jnp.float32)        # (g, n, n)
        s = s - jnp.max(s, axis=-1, keepdims=True)
        e = jnp.exp(s)
        attn = e * pl.reciprocal(jnp.sum(e, axis=-1, keepdims=True), approx=False)

        o_h = jnp.einsum('gnm,gme->gne',
                         attn.astype(compute_dtype), v.astype(compute_dtype),
                         preferred_element_type=jnp.float32)      # (g, n, dh)

        # Accumulate the output projection per head -> no lane-axis concat.
        y = y + jnp.dot(o_h.reshape(m, dim_head).astype(compute_dtype),
                        wout[lo:hi, :],
                        preferred_element_type=jnp.float32)       # (m, d)

    y = y + bout_ref[...].astype(jnp.float32)           # bias broadcast (1, d)
    o_ref[...] = y.astype(o_ref.dtype)
    # TODO(synk): torch.nn.Dropout is identity in eval / p=0.0, so it is omitted.


def _choose_groups_per_step(bp, n):
    """Pick how many (b,p) groups each grid step handles.

    Blocks are (groups*n, d) rows: aim for >=256 rows per step (fills the MXU M
    dimension on v5e/v6e/v7x) while keeping the grid >= 2 steps so both v7x
    TensorCores get work. Falls back to the full batch when bp has no suitable
    divisor (tiny inputs); a full-array block is always layout-legal.
    """
    best = bp
    for t in range(1, bp):                 # t < bp  ->  grid >= 2
        if bp % t:
            continue
        if (t * n) % 8:                    # keep the block's sublane dim 8-aligned
            continue
        best = t
        if t * n >= 256:
            break
    return best


def attention_block_pallas(x, w_qkv, w_out, b_out, *, heads, dim_head,
                           compute_dtype=None):
    """x: (b, p, n, d); w_qkv: (d, 3*heads*dim_head); w_out: (heads*dim_head, d); b_out: (d,)."""
    b, p, n, d = x.shape
    inner = heads * dim_head
    scale = dim_head ** (-0.5)
    bp = b * p

    groups = _choose_groups_per_step(bp, n)
    rows = groups * n
    grid = (bp // groups,)

    x2 = x.reshape(bp * n, d)              # row-major flatten; free reshape
    bias2d = b_out.reshape(1, d)
    cdt = compute_dtype if compute_dtype is not None else x.dtype

    kernel = functools.partial(_attention_kernel, groups=groups, n=n, d=d,
                               heads=heads, dim_head=dim_head, scale=scale,
                               compute_dtype=cdt)

    out2 = pl.pallas_call(
        kernel,
        out_shape=jax.ShapeDtypeStruct((bp * n, d), x.dtype),
        grid_spec=pltpu.PrefetchScalarGridSpec(
            num_scalar_prefetch=0,
            grid=grid,
            in_specs=[
                pl.BlockSpec((rows, d), lambda i: (i, 0)),          # activations
                pl.BlockSpec((d, 3 * inner), lambda i: (0, 0)),     # W_qkv (const)
                pl.BlockSpec((inner, d), lambda i: (0, 0)),         # W_out (const)
                pl.BlockSpec((1, d), lambda i: (0, 0)),             # bias (const)
            ],
            out_specs=pl.BlockSpec((rows, d), lambda i: (i, 0)),
        ),
        compiler_params=pltpu.CompilerParams(
            dimension_semantics=("parallel",)),
    )(x2, w_qkv, w_out, bias2d)

    return out2.reshape(b, p, n, d)


def attention_block_reference(x, w_qkv, w_out, b_out, *, heads, dim_head):
    b, p, n, d = x.shape
    inner = heads * dim_head
    scale = dim_head ** (-0.5)
    qkv = jnp.einsum('bpnd,de->bpne', x, w_qkv)
    q, k, v = jnp.split(qkv, 3, axis=-1)

    def split_heads(t):
        return t.reshape(b, p, n, heads, dim_head).transpose(0, 1, 3, 2, 4)

    q, k, v = split_heads(q), split_heads(k), split_heads(v)
    dots = jnp.einsum('bphnd,bphmd->bphnm', q, k) * scale
    attn = jax.nn.softmax(dots, axis=-1)
    out = jnp.einsum('bphnm,bphmd->bphnd', attn, v)
    out = out.transpose(0, 1, 3, 2, 4).reshape(b, p, n, inner)
    return jnp.einsum('bpni,id->bpnd', out, w_out) + b_out


if __name__ == "__main__":
    # Small shapes consistent with the module's forward: x is (b, p, n, dim)
    b, p, n, dim = 2, 2, 8, 32
    heads, dim_head = 4, 16
    inner = heads * dim_head

    key = jax.random.PRNGKey(0)
    kx, kq, ko, kb = jax.random.split(key, 4)

    x = jax.random.normal(kx, (b, p, n, dim), dtype=jnp.float32)
    # Weights stored as (in, out) so the kernel does x @ W (== torch Linear with W^T).
    w_qkv = jax.random.normal(kq, (dim, 3 * inner), dtype=jnp.float32) * 0.05
    w_out = jax.random.normal(ko, (inner, dim), dtype=jnp.float32) * 0.05
    b_out = jax.random.normal(kb, (dim,), dtype=jnp.float32) * 0.01

    y = attention_block_pallas(x, w_qkv, w_out, b_out,
                               heads=heads, dim_head=dim_head)
    y = jax.block_until_ready(y)

    y_ref = attention_block_reference(x, w_qkv, w_out, b_out,
                                      heads=heads, dim_head=dim_head)
    assert y.shape == (b, p, n, dim)
    assert jnp.allclose(y, y_ref, atol=1e-4, rtol=1e-4)

    print("KERNEL_OK")
</pallas_src>

<mosaic_0001>
module attributes {stable_mosaic.version = 11 : i64} {
  func.func @_attention_kernel(%arg0: i32, %arg1: memref<16x32xf32, #tpu.memory_space<vmem>>, %arg2: memref<32x192xf32, #tpu.memory_space<vmem>>, %arg3: memref<64x32xf32, #tpu.memory_space<vmem>>, %arg4: memref<1x32xf32, #tpu.memory_space<vmem>>, %arg5: memref<16x32xf32, #tpu.memory_space<vmem>>) attributes {dimension_semantics = [#tpu.dimension_semantics<parallel>], iteration_bounds = array<i64: 2>, scalar_prefetch = 0 : i64, scratch_operands = 0 : i64, tpu.core_type = #tpu.core_type<tc>, window_params = [{transform_indices = @transform_0, window_bounds = array<i64: 16, 32>}, {pipeline_mode = #tpu.pipeline_mode<synchronous>, transform_indices = @transform_1, window_bounds = array<i64: 32, 192>}, {pipeline_mode = #tpu.pipeline_mode<synchronous>, transform_indices = @transform_2, window_bounds = array<i64: 64, 32>}, {pipeline_mode = #tpu.pipeline_mode<synchronous>, transform_indices = @transform_3, window_bounds = array<i64: 1, 32>}, {transform_indices = @transform_4, window_bounds = array<i64: 16, 32>}]} {
    %c0 = arith.constant 0 : index
    %c0_0 = arith.constant 0 : index
    %0 = vector.load %arg1[%c0, %c0_0] : memref<16x32xf32, #tpu.memory_space<vmem>>, vector<16x32xf32>
    %c0_1 = arith.constant 0 : index
    %c0_2 = arith.constant 0 : index
    %1 = vector.load %arg2[%c0_1, %c0_2] : memref<32x192xf32, #tpu.memory_space<vmem>>, vector<32x192xf32>
    %c0_3 = arith.constant 0 : index
    %c0_4 = arith.constant 0 : index
    %2 = vector.load %arg3[%c0_3, %c0_4] : memref<64x32xf32, #tpu.memory_space<vmem>>, vector<64x32xf32>
    %cst = arith.constant dense<0.000000e+00> : vector<16x192xf32>
    %3 = tpu.matmul %0, %1, %cst {dimension_numbers = #tpu.dot_dimension_numbers<[1], [0], [0], [1], [0, 0, 1, 1], [], []>} : vector<16x32xf32>, vector<32x192xf32>, vector<16x192xf32> -> vector<16x192xf32>
    %cst_5 = arith.constant 0.000000e+00 : f32
    %4 = vector.broadcast %cst_5 : f32 to vector<16x32xf32>
    %5 = vector.extract_strided_slice %3 {offsets = [0, 0], sizes = [16, 16], strides = [1, 1]} : vector<16x192xf32> to vector<16x16xf32>
    %cst_6 = arith.constant 2.500000e-01 : f32
    %6 = vector.broadcast %cst_6 : f32 to vector<16x16xf32>
    %7 = arith.mulf %5, %6 : vector<16x16xf32>
    %8 = vector.shape_cast %7 : vector<16x16xf32> to vector<2x8x16xf32>
    %9 = vector.extract_strided_slice %3 {offsets = [0, 64], sizes = [16, 16], strides = [1, 1]} : vector<16x192xf32> to vector<16x16xf32>
    %10 = vector.shape_cast %9 : vector<16x16xf32> to vector<2x8x16xf32>
    %11 = vector.extract_strided_slice %3 {offsets = [0, 128], sizes = [16, 16], strides = [1, 1]} : vector<16x192xf32> to vector<16x16xf32>
    %12 = vector.shape_cast %11 : vector<16x16xf32> to vector<2x8x16xf32>
    "tpu.trace_start"() <{level = 10 : i32, message = "gne,gme->gnm"}> : () -> ()
    %cst_7 = arith.constant dense<0.000000e+00> : vector<2x8x8xf32>
    %13 = tpu.matmul %8, %10, %cst_7 {dimension_numbers = #tpu.dot_dimension_numbers<[2], [2], [1], [1], [0, 0, 0, 1, 1, 1], [0], [0]>} : vector<2x8x16xf32>, vector<2x8x16xf32>, vector<2x8x8xf32> -> vector<2x8x8xf32>
    "tpu.trace_stop"() : () -> ()
    %cst_8 = arith.constant dense<0xFF800000> : vector<2x8xf32>
    %14 = vector.multi_reduction <maximumf>, %13, %cst_8 [2] : vector<2x8x8xf32> to vector<2x8xf32>
    %15 = vector.shape_cast %14 : vector<2x8xf32> to vector<2x8x1xf32>
    %16 = vector.broadcast %15 : vector<2x8x1xf32> to vector<2x8x8xf32>
    %17 = arith.subf %13, %16 : vector<2x8x8xf32>
    %18 = math.exp %17 : vector<2x8x8xf32>
    %cst_9 = arith.constant dense<0.000000e+00> : vector<2x8xf32>
    %19 = vector.multi_reduction <add>, %18, %cst_9 [2] : vector<2x8x8xf32> to vector<2x8xf32>
    %20 = vector.shape_cast %19 : vector<2x8xf32> to vector<2x8x1xf32>
    %21 = tpu.reciprocal %20 : vector<2x8x1xf32> -> vector<2x8x1xf32>
    %22 = vector.broadcast %21 : vector<2x8x1xf32> to vector<2x8x8xf32>
    %23 = arith.mulf %18, %22 : vector<2x8x8xf32>
    "tpu.trace_start"() <{level = 10 : i32, message = "gnm,gme->gne"}> : () -> ()
    %cst_10 = arith.constant dense<0.000000e+00> : vector<2x8x16xf32>
    %24 = tpu.matmul %23, %12, %cst_10 {dimension_numbers = #tpu.dot_dimension_numbers<[2], [1], [1], [2], [0, 0, 0, 1, 1, 2], [0], [0]>} : vector<2x8x8xf32>, vector<2x8x16xf32>, vector<2x8x16xf32> -> vector<2x8x16xf32>
    "tpu.trace_stop"() : () -> ()
    %25 = vector.shape_cast %24 : vector<2x8x16xf32> to vector<16x16xf32>
    %26 = vector.extract_strided_slice %2 {offsets = [0, 0], sizes = [16, 32], strides = [1, 1]} : vector<64x32xf32> to vector<16x32xf32>
    %cst_11 = arith.constant dense<0.000000e+00> : vector<16x32xf32>
    %27 = tpu.matmul %25, %26, %cst_11 {dimension_numbers = #tpu.dot_dimension_numbers<[1], [0], [0], [1], [0, 0, 1, 1], [], []>} : vector<16x16xf32>, vector<16x32xf32>, vector<16x32xf32> -> vector<16x32xf32>
    %28 = arith.addf %4, %27 : vector<16x32xf32>
    %29 = vector.extract_strided_slice %3 {offsets = [0, 16], sizes = [16, 16], strides = [1, 1]} : vector<16x192xf32> to vector<16x16xf32>
    %cst_12 = arith.constant 2.500000e-01 : f32
    %30 = vector.broadcast %cst_12 : f32 to vector<16x16xf32>
    %31 = arith.mulf %29, %30 : vector<16x16xf32>
    %32 = vector.shape_cast %31 : vector<16x16xf32> to vector<2x8x16xf32>
    %33 = vector.extract_strided_slice %3 {offsets = [0, 80], sizes = [16, 16], strides = [1, 1]} : vector<16x192xf32> to vector<16x16xf32>
    %34 = vector.shape_cast %33 : vector<16x16xf32> to vector<2x8x16xf32>
    %35 = vector.extract_strided_slice %3 {offsets = [0, 144], sizes = [16, 16], strides = [1, 1]} : vector<16x192xf32> to vector<16x16xf32>
    %36 = vector.shape_cast %35 : vector<16x16xf32> to vector<2x8x16xf32>
    "tpu.trace_start"() <{level = 10 : i32, message = "gne,gme->gnm"}> : () -> ()
    %cst_13 = arith.constant dense<0.000000e+00> : vector<2x8x8xf32>
    %37 = tpu.matmul %32, %34, %cst_13 {dimension_numbers = #tpu.dot_dimension_numbers<[2], [2], [1], [1], [0, 0, 0, 1, 1, 1], [0], [0]>} : vector<2x8x16xf32>, vector<2x8x16xf32>, vector<2x8x8xf32> -> vector<2x8x8xf32>
    "tpu.trace_stop"() : () -> ()
    %cst_14 = arith.constant dense<0xFF800000> : vector<2x8xf32>
    %38 = vector.multi_reduction <maximumf>, %37, %cst_14 [2] : vector<2x8x8xf32> to vector<2x8xf32>
    %39 = vector.shape_cast %38 : vector<2x8xf32> to vector<2x8x1xf32>
    %40 = vector.broadcast %39 : vector<2x8x1xf32> to vector<2x8x8xf32>
    %41 = arith.subf %37, %40 : vector<2x8x8xf32>
    %42 = math.exp %41 : vector<2x8x8xf32>
    %cst_15 = arith.constant dense<0.000000e+00> : vector<2x8xf32>
    %43 = vector.multi_reduction <add>, %42, %cst_15 [2] : vector<2x8x8xf32> to vector<2x8xf32>
    %44 = vector.shape_cast %43 : vector<2x8xf32> to vector<2x8x1xf32>
    %45 = tpu.reciprocal %44 : vector<2x8x1xf32> -> vector<2x8x1xf32>
    %46 = vector.broadcast %45 : vector<2x8x1xf32> to vector<2x8x8xf32>
    %47 = arith.mulf %42, %46 : vector<2x8x8xf32>
    "tpu.trace_start"() <{level = 10 : i32, message = "gnm,gme->gne"}> : () -> ()
    %cst_16 = arith.constant dense<0.000000e+00> : vector<2x8x16xf32>
    %48 = tpu.matmul %47, %36, %cst_16 {dimension_numbers = #tpu.dot_dimension_numbers<[2], [1], [1], [2], [0, 0, 0, 1, 1, 2], [0], [0]>} : vector<2x8x8xf32>, vector<2x8x16xf32>, vector<2x8x16xf32> -> vector<2x8x16xf32>
    "tpu.trace_stop"() : () -> ()
    %49 = vector.shape_cast %48 : vector<2x8x16xf32> to vector<16x16xf32>
    %50 = vector.extract_strided_slice %2 {offsets = [16, 0], sizes = [16, 32], strides = [1, 1]} : vector<64x32xf32> to vector<16x32xf32>
    %cst_17 = arith.constant dense<0.000000e+00> : vector<16x32xf32>
    %51 = tpu.matmul %49, %50, %cst_17 {dimension_numbers = #tpu.dot_dimension_numbers<[1], [0], [0], [1], [0, 0, 1, 1], [], []>} : vector<16x16xf32>, vector<16x32xf32>, vector<16x32xf32> -> vector<16x32xf32>
    %52 = arith.addf %28, %51 : vector<16x32xf32>
    %53 = vector.extract_strided_slice %3 {offsets = [0, 32], sizes = [16, 16], strides = [1, 1]} : vector<16x192xf32> to vector<16x16xf32>
    %cst_18 = arith.constant 2.500000e-01 : f32
    %54 = vector.broadcast %cst_18 : f32 to vector<16x16xf32>
    %55 = arith.mulf %53, %54 : vector<16x16xf32>
    %56 = vector.shape_cast %55 : vector<16x16xf32> to vector<2x8x16xf32>
    %57 = vector.extract_strided_slice %3 {offsets = [0, 96], sizes = [16, 16], strides = [1, 1]} : vector<16x192xf32> to vector<16x16xf32>
    %58 = vector.shape_cast %57 : vector<16x16xf32> to vector<2x8x16xf32>
    %59 = vector.extract_strided_slice %3 {offsets = [0, 160], sizes = [16, 16], strides = [1, 1]} : vector<16x192xf32> to vector<16x16xf32>
    %60 = vector.shape_cast %59 : vector<16x16xf32> to vector<2x8x16xf32>
    "tpu.trace_start"() <{level = 10 : i32, message = "gne,gme->gnm"}> : () -> ()
    %cst_19 = arith.constant dense<0.000000e+00> : vector<2x8x8xf32>
    %61 = tpu.matmul %56, %58, %cst_19 {dimension_numbers = #tpu.dot_dimension_numbers<[2], [2], [1], [1], [0, 0, 0, 1, 1, 1], [0], [0]>} : vector<2x8x16xf32>, vector<2x8x16xf32>, vector<2x8x8xf32> -> vector<2x8x8xf32>
    "tpu.trace_stop"() : () -> ()
    %cst_20 = arith.constant dense<0xFF800000> : vector<2x8xf32>
    %62 = vector.multi_reduction <maximumf>, %61, %cst_20 [2] : vector<2x8x8xf32> to vector<2x8xf32>
    %63 = vector.shape_cast %62 : vector<2x8xf32> to vector<2x8x1xf32>
    %64 = vector.broadcast %63 : vector<2x8x1xf32> to vector<2x8x8xf32>
    %65 = arith.subf %61, %64 : vector<2x8x8xf32>
    %66 = math.exp %65 : vector<2x8x8xf32>
    %cst_21 = arith.constant dense<0.000000e+00> : vector<2x8xf32>
    %67 = vector.multi_reduction <add>, %66, %cst_21 [2] : vector<2x8x8xf32> to vector<2x8xf32>
    %68 = vector.shape_cast %67 : vector<2x8xf32> to vector<2x8x1xf32>
    %69 = tpu.reciprocal %68 : vector<2x8x1xf32> -> vector<2x8x1xf32>
    %70 = vector.broadcast %69 : vector<2x8x1xf32> to vector<2x8x8xf32>
    %71 = arith.mulf %66, %70 : vector<2x8x8xf32>
    "tpu.trace_start"() <{level = 10 : i32, message = "gnm,gme->gne"}> : () -> ()
    %cst_22 = arith.constant dense<0.000000e+00> : vector<2x8x16xf32>
    %72 = tpu.matmul %71, %60, %cst_22 {dimension_numbers = #tpu.dot_dimension_numbers<[2], [1], [1], [2], [0, 0, 0, 1, 1, 2], [0], [0]>} : vector<2x8x8xf32>, vector<2x8x16xf32>, vector<2x8x16xf32> -> vector<2x8x16xf32>
    "tpu.trace_stop"() : () -> ()
    %73 = vector.shape_cast %72 : vector<2x8x16xf32> to vector<16x16xf32>
    %74 = vector.extract_strided_slice %2 {offsets = [32, 0], sizes = [16, 32], strides = [1, 1]} : vector<64x32xf32> to vector<16x32xf32>
    %cst_23 = arith.constant dense<0.000000e+00> : vector<16x32xf32>
    %75 = tpu.matmul %73, %74, %cst_23 {dimension_numbers = #tpu.dot_dimension_numbers<[1], [0], [0], [1], [0, 0, 1, 1], [], []>} : vector<16x16xf32>, vector<16x32xf32>, vector<16x32xf32> -> vector<16x32xf32>
    %76 = arith.addf %52, %75 : vector<16x32xf32>
    %77 = vector.extract_strided_slice %3 {offsets = [0, 48], sizes = [16, 16], strides = [1, 1]} : vector<16x192xf32> to vector<16x16xf32>
    %cst_24 = arith.constant 2.500000e-01 : f32
    %78 = vector.broadcast %cst_24 : f32 to vector<16x16xf32>
    %79 = arith.mulf %77, %78 : vector<16x16xf32>
    %80 = vector.shape_cast %79 : vector<16x16xf32> to vector<2x8x16xf32>
    %81 = vector.extract_strided_slice %3 {offsets = [0, 112], sizes = [16, 16], strides = [1, 1]} : vector<16x192xf32> to vector<16x16xf32>
    %82 = vector.shape_cast %81 : vector<16x16xf32> to vector<2x8x16xf32>
    %83 = vector.extract_strided_slice %3 {offsets = [0, 176], sizes = [16, 16], strides = [1, 1]} : vector<16x192xf32> to vector<16x16xf32>
    %84 = vector.shape_cast %83 : vector<16x16xf32> to vector<2x8x16xf32>
    "tpu.trace_start"() <{level = 10 : i32, message = "gne,gme->gnm"}> : () -> ()
    %cst_25 = arith.constant dense<0.000000e+00> : vector<2x8x8xf32>
    %85 = tpu.matmul %80, %82, %cst_25 {dimension_numbers = #tpu.dot_dimension_numbers<[2], [2], [1], [1], [0, 0, 0, 1, 1, 1], [0], [0]>} : vector<2x8x16xf32>, vector<2x8x16xf32>, vector<2x8x8xf32> -> vector<2x8x8xf32>
    "tpu.trace_stop"() : () -> ()
    %cst_26 = arith.constant dense<0xFF800000> : vector<2x8xf32>
    %86 = vector.multi_reduction <maximumf>, %85, %cst_26 [2] : vector<2x8x8xf32> to vector<2x8xf32>
    %87 = vector.shape_cast %86 : vector<2x8xf32> to vector<2x8x1xf32>
    %88 = vector.broadcast %87 : vector<2x8x1xf32> to vector<2x8x8xf32>
    %89 = arith.subf %85, %88 : vector<2x8x8xf32>
    %90 = math.exp %89 : vector<2x8x8xf32>
    %cst_27 = arith.constant dense<0.000000e+00> : vector<2x8xf32>
    %91 = vector.multi_reduction <add>, %90, %cst_27 [2] : vector<2x8x8xf32> to vector<2x8xf32>
    %92 = vector.shape_cast %91 : vector<2x8xf32> to vector<2x8x1xf32>
    %93 = tpu.reciprocal %92 : vector<2x8x1xf32> -> vector<2x8x1xf32>
    %94 = vector.broadcast %93 : vector<2x8x1xf32> to vector<2x8x8xf32>
    %95 = arith.mulf %90, %94 : vector<2x8x8xf32>
    "tpu.trace_start"() <{level = 10 : i32, message = "gnm,gme->gne"}> : () -> ()
    %cst_28 = arith.constant dense<0.000000e+00> : vector<2x8x16xf32>
    %96 = tpu.matmul %95, %84, %cst_28 {dimension_numbers = #tpu.dot_dimension_numbers<[2], [1], [1], [2], [0, 0, 0, 1, 1, 2], [0], [0]>} : vector<2x8x8xf32>, vector<2x8x16xf32>, vector<2x8x16xf32> -> vector<2x8x16xf32>
    "tpu.trace_stop"() : () -> ()
    %97 = vector.shape_cast %96 : vector<2x8x16xf32> to vector<16x16xf32>
    %98 = vector.extract_strided_slice %2 {offsets = [48, 0], sizes = [16, 32], strides = [1, 1]} : vector<64x32xf32> to vector<16x32xf32>
    %cst_29 = arith.constant dense<0.000000e+00> : vector<16x32xf32>
    %99 = tpu.matmul %97, %98, %cst_29 {dimension_numbers = #tpu.dot_dimension_numbers<[1], [0], [0], [1], [0, 0, 1, 1], [], []>} : vector<16x16xf32>, vector<16x32xf32>, vector<16x32xf32> -> vector<16x32xf32>
    %100 = arith.addf %76, %99 : vector<16x32xf32>
    %c0_30 = arith.constant 0 : index
    %c0_31 = arith.constant 0 : index
    %101 = vector.load %arg4[%c0_30, %c0_31] : memref<1x32xf32, #tpu.memory_space<vmem>>, vector<1x32xf32>
    %102 = vector.broadcast %101 : vector<1x32xf32> to vector<16x32xf32>
    %103 = arith.addf %100, %102 : vector<16x32xf32>
    %c0_32 = arith.constant 0 : index
    %c0_33 = arith.constant 0 : index
    %104 = vector.load %arg5[%c0_32, %c0_33] : memref<16x32xf32, #tpu.memory_space<vmem>>, vector<16x32xf32>
    tpu.vector_store %arg5[%c0_32, %c0_33], %103 {strides = array<i32>} : memref<16x32xf32, #tpu.memory_space<vmem>>, vector<16x32xf32>,
    return
  }
  func.func @transform_0(%arg0: i32) -> (i32, i32) {
    %c0_i32 = arith.constant 0 : i32
    %c0_i32_0 = arith.constant 0 : i32
    return %arg0, %c0_i32 : i32, i32
  }
  func.func @transform_1(%arg0: i32) -> (i32, i32) {
    %c0_i32 = arith.constant 0 : i32
    %c0_i32_0 = arith.constant 0 : i32
    %c0_i32_1 = arith.constant 0 : i32
    return %c0_i32, %c0_i32_0 : i32, i32
  }
  func.func @transform_2(%arg0: i32) -> (i32, i32) {
    %c0_i32 = arith.constant 0 : i32
    %c0_i32_0 = arith.constant 0 : i32
    %c0_i32_1 = arith.constant 0 : i32
    return %c0_i32, %c0_i32_0 : i32, i32
  }
  func.func @transform_3(%arg0: i32) -> (i32, i32) {
    %c0_i32 = arith.constant 0 : i32
    %c0_i32_0 = arith.constant 0 : i32
    %c0_i32_1 = arith.constant 0 : i32
    return %c0_i32, %c0_i32_0 : i32, i32
  }
  func.func @transform_4(%arg0: i32) -> (i32, i32) {
    %c0_i32 = arith.constant 0 : i32
    %c0_i32_0 = arith.constant 0 : i32
    return %arg0, %c0_i32 : i32, i32
  }
}

</mosaic_0001>

<llo_original>
// kernel: tpu_custom_call.1
$region0: #{tpu_custom_call.1}
  #allocation0 [shape = 'u32[]', space=smem, size = 0x4, offset = 0x4, fixed_abs, tag = 'smem constant byte address 0x4 - core index']
  #allocation1 [shape = 'u32[144,128]{1,0:T(1,128)}', space=vmem, size = 0x12000, scoped, tag = 'internal scratch']
  %s0 = inlined_call_operand.vmem [shape: f32[32,32], index: 0, kind: input, shape index: {}]
  %s1 = inlined_call_operand.vmem [shape: f32[32,192], index: 1, kind: input, shape index: {}]
  %s2 = inlined_call_operand.vmem [shape: f32[64,32], index: 2, kind: input, shape index: {}]
  %s3 = inlined_call_operand.vmem [shape: f32[1,32], index: 3, kind: input, shape index: {}]
  %s4 = inlined_call_operand.hbm [shape: f32[32,32], index: 4, kind: output, shape index: {}]
  %s5 = sld [smem:[#allocation0]]
  $region49: #{tpu_custom_call.1} parent=0
    _
  %s7 = ssub.s32 1, %s5
  %s8 = scalar_select 0, %s7, %s5
  $region1: #{tpu_custom_call.1} parent=0
    #allocation2 [shape = 'u8[16384]{0}', space=vmem, size = 0x4000, scoped, tag = 'output window, operand 0']
    #allocation3 [shape = 's32[2]{0}', space=sflag, size = 0x8, scoped, tag = 'scoped memory for tpu_custom_call.1']
    %9 = vsyncpa [#allocation3], 0
    %s10 = scalar_lea.sflag [#allocation3], 1
    %11 = vsyncpa %s10, 0
    loop: start=0, step=1, limit=4
    $region2: #{tpu_custom_call.1} parent=1 // loop_pre_header
      _
    $region3: #{tpu_custom_call.1} parent=1 // loop_header
      %s13 = sphi 0, %s17
      %p14 = scmp.ge.s32.totalorder %s13, 4
      %s23 = sphi 0, %s25
      %s26 = sphi 0, %s23
      %s27 = sphi 0, %s26
      %s43 = sphi 0, %s27
      %s47 = sphi 0, %s47
      %s49 = sphi 0, %s47
      %s50 = sphi 0, %s49
      %s64 = sphi 0, %s50
      %s68 = sphi 0, %s68
      %s70 = sphi 0, %s68
      %s71 = sphi 0, %s70
      %s85 = sphi 0, %s71
      %s89 = sphi 0, %s89
      %s91 = sphi 0, %s89
      %s92 = sphi 0, %s91
      %s106 = sphi 0, %s92
      %s112 = sphi 0, %s114
      %s115 = sphi 0, %s112
      %s116 = sphi 0, %s115
      %s132 = sphi 0, %s116
    $region4: #{tpu_custom_call.1} parent=1 // loop_header_branch
      %16 = sbr.rel (%p14) target = $region8
    $region5: #{tpu_custom_call.1} parent=1 // loop_body
      %s18 = ssub.s32 %s13, 1
      %s19 = ssub.s32 %s13, 2
      %s20 = sadd.s32 %s13, 1
      %s21 = ssub.s32 %s13, %s20
      %p22 = scmp.eq.s32.totalorder %s21, 0
      %s24 = sadd.s32 %s23, 1
      %s25 = scalar_select %p22, %s23, %s24
      %p28 = pneg %p22
      %p29 = scmp.eq.s32.totalorder %s13, 1
      %p30 = por %p28, %p29
      %p31 = scmp.ne.s32.totalorder %s23, %s26
      %p32 = scmp.eq.s32.totalorder %s13, 0
      %p33 = por %p31, %p32
      %p34 = scmp.ne.s32.totalorder %s23, %s26
      %p35 = scmp.eq.s32.totalorder %s18, 1
      %p36 = por %p34, %p35
      %p37 = scmp.ne.s32.totalorder %s26, %s27
      %p38 = scmp.eq.s32.totalorder %s18, 0
      %p39 = por %p37, %p38
      %p40 = scmp.ne.s32.totalorder %s26, %s27
      %p41 = scmp.eq.s32.totalorder %s19, 1
      %p42 = por %p40, %p41
      %p44 = scmp.ne.s32.totalorder %s27, %s43
      %p45 = scmp.eq.s32.totalorder %s19, 0
      %p46 = por %p44, %p45
      %s48 = sadd.s32 %s47, 1
      %p51 = scmp.eq.s32.totalorder %s13, 1
      %p52 = scmp.ne.s32.totalorder %s47, %s49
      %p53 = scmp.eq.s32.totalorder %s13, 0
      %p54 = por %p52, %p53
      %p55 = scmp.ne.s32.totalorder %s47, %s49
      %p56 = scmp.eq.s32.totalorder %s18, 1
      %p57 = por %p55, %p56
      %p58 = scmp.ne.s32.totalorder %s49, %s50
      %p59 = scmp.eq.s32.totalorder %s18, 0
      %p60 = por %p58, %p59
      %p61 = scmp.ne.s32.totalorder %s49, %s50
      %p62 = scmp.eq.s32.totalorder %s19, 1
      %p63 = por %p61, %p62
      %p65 = scmp.ne.s32.totalorder %s50, %s64
      %p66 = scmp.eq.s32.totalorder %s19, 0
      %p67 = por %p65, %p66
      %s69 = sadd.s32 %s68, 1
      %p72 = scmp.eq.s32.totalorder %s13, 1
      %p73 = scmp.ne.s32.totalorder %s68, %s70
      %p74 = scmp.eq.s32.totalorder %s13, 0
      %p75 = por %p73, %p74
      %p76 = scmp.ne.s32.totalorder %s68, %s70
      %p77 = scmp.eq.s32.totalorder %s18, 1
      %p78 = por %p76, %p77
      %p79 = scmp.ne.s32.totalorder %s70, %s71
      %p80 = scmp.eq.s32.totalorder %s18, 0
      %p81 = por %p79, %p80
      %p82 = scmp.ne.s32.totalorder %s70, %s71
      %p83 = scmp.eq.s32.totalorder %s19, 1
      %p84 = por %p82, %p83
      %p86 = scmp.ne.s32.totalorder %s71, %s85
      %p87 = scmp.eq.s32.totalorder %s19, 0
      %p88 = por %p86, %p87
      %s90 = sadd.s32 %s89, 1
      %p93 = scmp.eq.s32.totalorder %s13, 1
      %p94 = scmp.ne.s32.totalorder %s89, %s91
      %p95 = scmp.eq.s32.totalorder %s13, 0
      %p96 = por %p94, %p95
      %p97 = scmp.ne.s32.totalorder %s89, %s91
      %p98 = scmp.eq.s32.totalorder %s18, 1
      %p99 = por %p97, %p98
      %p100 = scmp.ne.s32.totalorder %s91, %s92
      %p101 = scmp.eq.s32.totalorder %s18, 0
      %p102 = por %p100, %p101
      %p103 = scmp.ne.s32.totalorder %s91, %s92
      %p104 = scmp.eq.s32.totalorder %s19, 1
      %p105 = por %p103, %p104
      %p107 = scmp.ne.s32.totalorder %s92, %s106
      %p108 = scmp.eq.s32.totalorder %s19, 0
      %p109 = por %p107, %p108
      %s110 = ssub.s32 %s13, %s20
      %p111 = scmp.eq.s32.totalorder %s110, 0
      %s113 = sadd.s32 %s112, 1
      %s114 = scalar_select %p111, %s112, %s113
      %p117 = pneg %p111
      %p118 = scmp.eq.s32.totalorder %s13, 1
      %p119 = por %p117, %p118
      %p120 = scmp.ne.s32.totalorder %s112, %s115
      %p121 = scmp.eq.s32.totalorder %s13, 0
      %p122 = por %p120, %p121
      %p123 = scmp.ne.s32.totalorder %s112, %s115
      %p124 = scmp.eq.s32.totalorder %s18, 1
      %p125 = por %p123, %p124
      %p126 = scmp.ne.s32.totalorder %s115, %s116
      %p127 = scmp.eq.s32.totalorder %s18, 0
      %p128 = por %p126, %p127
      %p129 = scmp.ne.s32.totalorder %s115, %s116
      %p130 = scmp.eq.s32.totalorder %s19, 1
      %p131 = por %p129, %p130
      %p133 = scmp.ne.s32.totalorder %s116, %s132
      %p134 = scmp.eq.s32.totalorder %s19, 0
      %p135 = por %p133, %p134
      %p136 = scmp.le.s32.totalorder 1, %s13
      %p137 = scmp.lt.s32.totalorder %s13, 3
      %p138 = pnand %p136, %p137
      %p139 = pneg %p138
      // Predicated region
      $region9: #{tpu_custom_call.1} parent=5 // pred_check
        _
      $region10: #{tpu_custom_call.1} parent=5 // pred_check_branch
        %141 = sbr.rel (%p138) target = $region12
      $region11: #{tpu_custom_call.1} parent=5 // pred_region
        %s142 = ssub.s32 %s13, 1
        // Predicated region
        $region13: #{tpu_custom_call.1} parent=11 // pred_check
          %p143 = pneg %p60
        $region14: #{tpu_custom_call.1} parent=11 // pred_check_branch
          %145 = sbr.rel (%p143) target = $region16
        $region15: #{tpu_custom_call.1} parent=11 // pred_region
          _
        $region16: #{tpu_custom_call.1} parent=11 // pred_fallthru
          _
        // Predicated region
        $region17: #{tpu_custom_call.1} parent=11 // pred_check
          %p146 = pneg %p81
        $region18: #{tpu_custom_call.1} parent=11 // pred_check_branch
          %148 = sbr.rel (%p146) target = $region20
        $region19: #{tpu_custom_call.1} parent=11 // pred_region
          _
        $region20: #{tpu_custom_call.1} parent=11 // pred_fallthru
          _
        // Predicated region
        $region21: #{tpu_custom_call.1} parent=11 // pred_check
          %p149 = pneg %p102
        $region22: #{tpu_custom_call.1} parent=11 // pred_check_branch
          %151 = sbr.rel (%p149) target = $region24
        $region23: #{tpu_custom_call.1} parent=11 // pred_region
          _
        $region24: #{tpu_custom_call.1} parent=11 // pred_fallthru
          _
      $region12: #{tpu_custom_call.1} parent=5 // pred_fallthru
        _
      %p152 = scmp.lt.s32.totalorder %s13, 2
      // Predicated region
      $region25: #{tpu_custom_call.1} parent=5 // pred_check
        %p153 = pneg %p152
      $region26: #{tpu_custom_call.1} parent=5 // pred_check_branch
        %155 = sbr.rel (%p153) target = $region28
      $region27: #{tpu_custom_call.1} parent=5 // pred_region
        // Predicated region
        $region29: #{tpu_custom_call.1} parent=27 // pred_check
          %p156 = pneg %p33
        $region30: #{tpu_custom_call.1} parent=27 // pred_check_branch
          %158 = sbr.rel (%p156) target = $region32
        $region31: #{tpu_custom_call.1} parent=27 // pred_region
          %s159 = smul.u32 2, %s13
          %p160 = scmp.lt.s32.totalorder %s159, 3
          %s161 = scalar_select %p160, %s159, 3
          %s162 = smul.addr %s161, 8
          %s163 = scalar_lea.vmem %s0, %s162
          %s164 = smul.u32 2, %s13
        $region32: #{tpu_custom_call.1} parent=27 // pred_fallthru
          _
      $region28: #{tpu_custom_call.1} parent=5 // pred_fallthru
        _
      %p165 = scmp.le.s32.totalorder 1, %s13
      %p166 = scmp.lt.s32.totalorder %s13, 3
      %p167 = pnand %p165, %p166
      %p168 = pneg %p167
      // Predicated region
      $region33: #{tpu_custom_call.1} parent=5 // pred_check
        _
      $region34: #{tpu_custom_call.1} parent=5 // pred_check_branch
        %170 = sbr.rel (%p167) target = $region36
      $region35: #{tpu_custom_call.1} parent=5 // pred_region
        %s171 = ssub.s32 %s13, 1
        %s172 = smul.u32 2, %s18
        %p173 = scmp.lt.s32.totalorder %s172, 3
        %s174 = scalar_select %p173, %s172, 3
        %s175 = smul.addr %s174, 8
        %s176 = scalar_lea.vmem %s0, %s175
        %p177 = pneg %p39
        %p178 = pneg %p36
        %p179 = pneg %p60
        %p180 = pneg %p57
        %p181 = pneg %p81
        %p182 = pneg %p78
        %p183 = pneg %p102
        %p184 = pneg %p99
        %p185 = pneg %p128
        %p186 = pneg %p125
        %s187 = sand.u32 %s115, 1
        %s188 = scalar_lea.sflag [#allocation3], %s187
        %s189 = sand.u32 %s115, 1
        %s190 = smul.addr %s189, 16
        %s191 = scalar_lea.vmem [#allocation2], %s190
        %s192 = smul.u32 2, %s18
        %p193 = scmp.lt.s32.totalorder %s192, 3
        %s194 = scalar_select %p193, %s192, 3
        %s195 = smul.addr %s194, 8
        %s196 = scalar_lea.vmem %s0, %s195
        %s197 = smul.u32 2, %s18
        %s198 = smul.u32 2, %s18
        %v199 = vld [vmem:[%s196] sm:$0xff]
        %v200 = vld [vmem:[%s196 + $0x8] sm:$0xff]
        %v201 = vld [vmem:[%s1] sm:$0xff]
        %v202 = vld [vmem:[%s1 + $0x8] sm:$0xff]
        %v203 = vld [vmem:[%s1 + $0x10] sm:$0xff]
        %v204 = vld [vmem:[%s1 + $0x18] sm:$0xff]
        %v205 = vld [vmem:[%s1 + $0x20] sm:$0xff]
        %v206 = vld [vmem:[%s1 + $0x28] sm:$0xff]
        %v207 = vld [vmem:[%s1 + $0x30] sm:$0xff]
        %v208 = vld [vmem:[%s1 + $0x38] sm:$0xff]
        %v209 = vld [vmem:[%s2] sm:$0xff]
        %v210 = vld [vmem:[%s2 + $0x8] sm:$0xff]
        %v211 = vld [vmem:[%s2 + $0x10] sm:$0xff]
        %v212 = vld [vmem:[%s2 + $0x18] sm:$0xff]
        %v213 = vld [vmem:[%s2 + $0x20] sm:$0xff]
        %v214 = vld [vmem:[%s2 + $0x28] sm:$0xff]
        %v215 = vld [vmem:[%s2 + $0x30] sm:$0xff]
        %v216 = vld [vmem:[%s2 + $0x38] sm:$0xff]
        %vm217 = vcmask 261120
        %v219 = vsel %vm217, %v199, 0
        %v222 = vsel %vm217, %v200, 0
        %224 = vmatprep.subr.mxu0 %v202
        %225 = vmatpush1.msra.mxu0 %v201
        %226 = vmatprep.subr.mxu0 %v204
        %227 = vmatpush1.msra.mxu0 %v203
        %228 = vmatprep.subr.mxu0 %v206
        %229 = vmatpush1.msra.mxu0 %v205
        %230 = vmatprep.subr.mxu0 %v208
        %231 = vmatpush1.msra.mxu0 %v207
        %232 = vmatprep.subr.mxu0 0.0
        %233 = vmatpush1.msra.mxu0 0.0
        %234 = vmatprep.subr.mxu0 0.0
        %235 = vmatpush1.msra.mxu0 0.0
        %236 = vmatprep.subr.mxu0 0.0
        %237 = vmatpush1.msra.mxu0 0.0
        %238 = vmatprep.subr.mxu0 0.0
        %239 = vmatpush1.msra.mxu0 0.0
        %240 = vmatprep.subr.mxu0 0.0
        %241 = vmatpush1.msra.mxu0 0.0
        %242 = vmatprep.subr.mxu0 0.0
        %243 = vmatpush1.msra.mxu0 0.0
        %244 = vmatprep.subr.mxu0 0.0
        %245 = vmatpush1.msra.mxu0 0.0
        %246 = vmatprep.subr.mxu0 0.0
        %247 = vmatpush1.msra.mxu0 0.0
        %248 = vmatprep.subr.mxu0 0.0
        %249 = vmatpush1.msra.mxu0 0.0
        %250 = vmatprep.subr.mxu0 0.0
        %251 = vmatpush1.msra.mxu0 0.0
        %252 = vmatprep.subr.mxu0 0.0
        %253 = vmatpush1.msra.mxu0 0.0
        %254 = vmatprep.subr.mxu0 0.0
        %255 = vmatpush1.msra.mxu0 0.0
        %256 = vmatprep.subr.mxu0 0.0
        %257 = vmatpush1.msra.mxu0 0.0
        %258 = vmatprep.subr.mxu0 0.0
        %259 = vmatpush1.msra.mxu0 0.0
        %260 = vmatprep.subr.mxu0 0.0
        %261 = vmatpush1.msra.mxu0 0.0
        %262 = vmatprep.subr.mxu0 0.0
        %263 = vmatpush1.msra.mxu0 0.0
        %264 = vmatprep.subr.mxu0 0.0
        %265 = vmatpush1.msra.mxu0 0.0
        %266 = vmatprep.subr.mxu0 0.0
        %267 = vmatpush1.msra.mxu0 0.0
        %268 = vmatprep.subr.mxu0 0.0
        %269 = vmatpush1.msra.mxu0 0.0
        %270 = vmatprep.subr.mxu0 0.0
        %271 = vmatpush1.msra.mxu0 0.0
        %272 = vmatprep.subr.mxu0 0.0
        %273 = vmatpush1.msra.mxu0 0.0
        %274 = vmatprep.subr.mxu0 0.0
        %275 = vmatpush1.msra.mxu0 0.0
        %276 = vmatprep.subr.mxu0 0.0
        %277 = vmatpush1.msra.mxu0 0.0
        %278 = vmatprep.subr.mxu0 0.0
        %279 = vmatpush1.msra.mxu0 0.0
        %280 = vmatprep.subr.mxu0 0.0
        %281 = vmatpush1.msra.mxu0 0.0
        %282 = vmatprep.subr.mxu0 0.0
        %283 = vmatpush1.msra.mxu0 0.0
        %284 = vmatprep.subr.mxu0 0.0
        %285 = vmatpush1.msra.mxu0 0.0
        %286 = vmatprep.subr.mxu0 0.0
        %287 = vmatpush1.msra.mxu0 0.0
        %288 = vmatprep.mubr.f32.mxu0 0.0
        %289 = vmatmul.mubr.f32.gmra.mrb[0].mxu0 %v219
        %v290 = vpop.f32.mrb[0].mxu0
        %v291 = vadd.f32 0.0, %v290
        %v292 = vpop.f32.mrb[0].mxu0
        %v293 = vadd.f32 0.0, %v292
        %294 = vmatprep.mubr.f32.mxu0 0.0
        %295 = vmatmul.mubr.f32.gmra.mrb[0].mxu0 %v222
        %v296 = vpop.f32.mrb[0].mxu0
        %v297 = vadd.f32 0.0, %v296
        %v298 = vpop.f32.mrb[0].mxu0
        %v299 = vadd.f32 0.0, %v298
        %300 = vdwg.mxu0
        %v301 = vmul.f32 %v291, 0.25
        %v302 = vmul.f32 %v297, 0.25
        %304 = vrot.lane.b32.xlu0 %v291, 64
        %v305 = vpop.permute.xlu0 %304
        %vm306 = vcmask 130048
        %v308 = vsel %vm306, %v301, 0
        %v310 = vsel %vm306, %v305, 0
        %312 = vmatprep.subr.mxu0 0.0
        %313 = vmatpush1.xpose.msra.mxu0 %v310
        %314 = vmatprep.subr.mxu0 0.0
        %315 = vmatpush1.xpose.msra.mxu0 0.0
        %316 = vmatprep.subr.mxu0 0.0
        %317 = vmatpush1.xpose.msra.mxu0 0.0
        %318 = vmatprep.subr.mxu0 0.0
        %319 = vmatpush1.xpose.msra.mxu0 0.0
        %320 = vmatprep.subr.mxu0 0.0
        %321 = vmatpush1.xpose.msra.mxu0 0.0
        %322 = vmatprep.subr.mxu0 0.0
        %323 = vmatpush1.xpose.msra.mxu0 0.0
        %324 = vmatprep.subr.mxu0 0.0
        %325 = vmatpush1.xpose.msra.mxu0 0.0
        %326 = vmatprep.subr.mxu0 0.0
        %327 = vmatpush1.xpose.msra.mxu0 0.0
        %328 = vmatprep.subr.mxu0 0.0
        %329 = vmatpush1.xpose.msra.mxu0 0.0
        %330 = vmatprep.subr.mxu0 0.0
        %331 = vmatpush1.xpose.msra.mxu0 0.0
        %332 = vmatprep.subr.mxu0 0.0
        %333 = vmatpush1.xpose.msra.mxu0 0.0
        %334 = vmatprep.subr.mxu0 0.0
        %335 = vmatpush1.xpose.msra.mxu0 0.0
        %336 = vmatprep.subr.mxu0 0.0
        %337 = vmatpush1.xpose.msra.mxu0 0.0
        %338 = vmatprep.subr.mxu0 0.0
        %339 = vmatpush1.xpose.msra.mxu0 0.0
        %340 = vmatprep.subr.mxu0 0.0
        %341 = vmatpush1.xpose.msra.mxu0 0.0
        %342 = vmatprep.subr.mxu0 0.0
        %343 = vmatpush1.xpose.msra.mxu0 0.0
        %344 = vmatprep.subr.mxu0 0.0
        %345 = vmatpush1.xpose.msra.mxu0 0.0
        %346 = vmatprep.subr.mxu0 0.0
        %347 = vmatpush1.xpose.msra.mxu0 0.0
        %348 = vmatprep.subr.mxu0 0.0
        %349 = vmatpush1.xpose.msra.mxu0 0.0
        %350 = vmatprep.subr.mxu0 0.0
        %351 = vmatpush1.xpose.msra.mxu0 0.0
        %352 = vmatprep.subr.mxu0 0.0
        %353 = vmatpush1.xpose.msra.mxu0 0.0
        %354 = vmatprep.subr.mxu0 0.0
        %355 = vmatpush1.xpose.msra.mxu0 0.0
        %356 = vmatprep.subr.mxu0 0.0
        %357 = vmatpush1.xpose.msra.mxu0 0.0
        %358 = vmatprep.subr.mxu0 0.0
        %359 = vmatpush1.xpose.msra.mxu0 0.0
        %360 = vmatprep.subr.mxu0 0.0
        %361 = vmatpush1.xpose.msra.mxu0 0.0
        %362 = vmatprep.subr.mxu0 0.0
        %363 = vmatpush1.xpose.msra.mxu0 0.0
        %364 = vmatprep.subr.mxu0 0.0
        %365 = vmatpush1.xpose.msra.mxu0 0.0
        %366 = vmatprep.subr.mxu0 0.0
        %367 = vmatpush1.xpose.msra.mxu0 0.0
        %368 = vmatprep.subr.mxu0 0.0
        %369 = vmatpush1.xpose.msra.mxu0 0.0
        %370 = vmatprep.subr.mxu0 0.0
        %371 = vmatpush1.xpose.msra.mxu0 0.0
        %372 = vmatprep.subr.mxu0 0.0
        %373 = vmatpush1.xpose.msra.mxu0 0.0
        %374 = vmatprep.subr.mxu0 0.0
        %375 = vmatpush1.xpose.msra.mxu0 0.0
        %376 = vmatprep.mubr.f32.mxu0 0.0
        %377 = vmatmul.mubr.f32.gmra.mrb[0].mxu0 %v308
        %v378 = vpop.f32.mrb[0].mxu0
        %v379 = vadd.f32 0.0, %v378
        %v380 = vpop.f32.mrb[0].mxu0
        %381 = vdwg.mxu0
        %383 = vrot.lane.b32.xlu0 %v297, 64
        %v384 = vpop.permute.xlu0 %383
        %v386 = vsel %vm306, %v302, 0
        %v388 = vsel %vm306, %v384, 0
        %390 = vmatprep.subr.mxu0 0.0
        %391 = vmatpush1.xpose.msra.mxu0 %v388
        %392 = vmatprep.subr.mxu0 0.0
        %393 = vmatpush1.xpose.msra.mxu0 0.0
        %394 = vmatprep.subr.mxu0 0.0
        %395 = vmatpush1.xpose.msra.mxu0 0.0
        %396 = vmatprep.subr.mxu0 0.0
        %397 = vmatpush1.xpose.msra.mxu0 0.0
        %398 = vmatprep.subr.mxu0 0.0
        %399 = vmatpush1.xpose.msra.mxu0 0.0
        %400 = vmatprep.subr.mxu0 0.0
        %401 = vmatpush1.xpose.msra.mxu0 0.0
        %402 = vmatprep.subr.mxu0 0.0
        %403 = vmatpush1.xpose.msra.mxu0 0.0
        %404 = vmatprep.subr.mxu0 0.0
        %405 = vmatpush1.xpose.msra.mxu0 0.0
        %406 = vmatprep.subr.mxu0 0.0
        %407 = vmatpush1.xpose.msra.mxu0 0.0
        %408 = vmatprep.subr.mxu0 0.0
        %409 = vmatpush1.xpose.msra.mxu0 0.0
        %410 = vmatprep.subr.mxu0 0.0
        %411 = vmatpush1.xpose.msra.mxu0 0.0
        %412 = vmatprep.subr.mxu0 0.0
        %413 = vmatpush1.xpose.msra.mxu0 0.0
        %414 = vmatprep.subr.mxu0 0.0
        %415 = vmatpush1.xpose.msra.mxu0 0.0
        %416 = vmatprep.subr.mxu0 0.0
        %417 = vmatpush1.xpose.msra.mxu0 0.0
        %418 = vmatprep.subr.mxu0 0.0
        %419 = vmatpush1.xpose.msra.mxu0 0.0
        %420 = vmatprep.subr.mxu0 0.0
        %421 = vmatpush1.xpose.msra.mxu0 0.0
        %422 = vmatprep.subr.mxu0 0.0
        %423 = vmatpush1.xpose.msra.mxu0 0.0
        %424 = vmatprep.subr.mxu0 0.0
        %425 = vmatpush1.xpose.msra.mxu0 0.0
        %426 = vmatprep.subr.mxu0 0.0
        %427 = vmatpush1.xpose.msra.mxu0 0.0
        %428 = vmatprep.subr.mxu0 0.0
        %429 = vmatpush1.xpose.msra.mxu0 0.0
        %430 = vmatprep.subr.mxu0 0.0
        %431 = vmatpush1.xpose.msra.mxu0 0.0
        %432 = vmatprep.subr.mxu0 0.0
        %433 = vmatpush1.xpose.msra.mxu0 0.0
        %434 = vmatprep.subr.mxu0 0.0
        %435 = vmatpush1.xpose.msra.mxu0 0.0
        %436 = vmatprep.subr.mxu0 0.0
        %437 = vmatpush1.xpose.msra.mxu0 0.0
        %438 = vmatprep.subr.mxu0 0.0
        %439 = vmatpush1.xpose.msra.mxu0 0.0
        %440 = vmatprep.subr.mxu0 0.0
        %441 = vmatpush1.xpose.msra.mxu0 0.0
        %442 = vmatprep.subr.mxu0 0.0
        %443 = vmatpush1.xpose.msra.mxu0 0.0
        %444 = vmatprep.subr.mxu0 0.0
        %445 = vmatpush1.xpose.msra.mxu0 0.0
        %446 = vmatprep.subr.mxu0 0.0
        %447 = vmatpush1.xpose.msra.mxu0 0.0
        %448 = vmatprep.subr.mxu0 0.0
        %449 = vmatpush1.xpose.msra.mxu0 0.0
        %450 = vmatprep.subr.mxu0 0.0
        %451 = vmatpush1.xpose.msra.mxu0 0.0
        %452 = vmatprep.subr.mxu0 0.0
        %453 = vmatpush1.xpose.msra.mxu0 0.0
        %454 = vmatprep.mubr.f32.mxu0 0.0
        %455 = vmatmul.mubr.f32.gmra.mrb[0].mxu0 %v386
        %v456 = vpop.f32.mrb[0].mxu0
        %v457 = vadd.f32 0.0, %v456
        %v458 = vpop.f32.mrb[0].mxu0
        %459 = vdwg.mxu0
        %vm460 = vcmask 64512
        %v461 = vsel %vm460, %v379, -inf
        %462 = vmax.xlane.f32.xlu0 %v461
        %v463 = vpop.xlane.xlu0 %462
        %v464 = vsel %vm460, %v457, -inf
        %465 = vmax.xlane.f32.xlu0 %v464
        %v466 = vpop.xlane.xlu0 %465
        %v467 = vsub.f32 %v379, %v463
        %v468 = vsub.f32 %v457, %v466
        %v469 = vmul.f32 %v467, 1.442695
        %v470 = vpow.pop %v469
        %v471 = vmul.f32 %v468, 1.442695
        %v472 = vpow.pop %v471
        %v473 = vsel %vm460, %v470, 0.0
        %474 = vadd.xlane.f32.xlu0 %v473
        %v475 = vpop.xlane.xlu0 %474
        %v476 = vsel %vm460, %v472, 0.0
        %477 = vadd.xlane.f32.xlu0 %v476
        %v478 = vpop.xlane.xlu0 %477
        %v479 = vrcp.pop %v475
        %v480 = vrcp.pop %v478
        %v481 = vmul.f32 %v470, %v479
        %v482 = vmul.f32 %v472, %v480
        %v484 = vsel %vm460, %v481, 0
        %486 = vmatprep.subr.mxu0 0.0
        %487 = vmatpush1.msra.mxu0 %v293
        %488 = vmatprep.subr.mxu0 0.0
        %489 = vmatpush1.msra.mxu0 0.0
        %490 = vmatprep.subr.mxu0 0.0
        %491 = vmatpush1.msra.mxu0 0.0
        %492 = vmatprep.subr.mxu0 0.0
        %493 = vmatpush1.msra.mxu0 0.0
        %494 = vmatprep.subr.mxu0 0.0
        %495 = vmatpush1.msra.mxu0 0.0
        %496 = vmatprep.subr.mxu0 0.0
        %497 = vmatpush1.msra.mxu0 0.0
        %498 = vmatprep.subr.mxu0 0.0
        %499 = vmatpush1.msra.mxu0 0.0
        %500 = vmatprep.subr.mxu0 0.0
        %501 = vmatpush1.msra.mxu0 0.0
        %502 = vmatprep.subr.mxu0 0.0
        %503 = vmatpush1.msra.mxu0 0.0
        %504 = vmatprep.subr.mxu0 0.0
        %505 = vmatpush1.msra.mxu0 0.0
        %506 = vmatprep.subr.mxu0 0.0
        %507 = vmatpush1.msra.mxu0 0.0
        %508 = vmatprep.subr.mxu0 0.0
        %509 = vmatpush1.msra.mxu0 0.0
        %510 = vmatprep.subr.mxu0 0.0
        %511 = vmatpush1.msra.mxu0 0.0
        %512 = vmatprep.subr.mxu0 0.0
        %513 = vmatpush1.msra.mxu0 0.0
        %514 = vmatprep.subr.mxu0 0.0
        %515 = vmatpush1.msra.mxu0 0.0
        %516 = vmatprep.subr.mxu0 0.0
        %517 = vmatpush1.msra.mxu0 0.0
        %518 = vmatprep.subr.mxu0 0.0
        %519 = vmatpush1.msra.mxu0 0.0
        %520 = vmatprep.subr.mxu0 0.0
        %521 = vmatpush1.msra.mxu0 0.0
        %522 = vmatprep.subr.mxu0 0.0
        %523 = vmatpush1.msra.mxu0 0.0
        %524 = vmatprep.subr.mxu0 0.0
        %525 = vmatpush1.msra.mxu0 0.0
        %526 = vmatprep.subr.mxu0 0.0
        %527 = vmatpush1.msra.mxu0 0.0
        %528 = vmatprep.subr.mxu0 0.0
        %529 = vmatpush1.msra.mxu0 0.0
        %530 = vmatprep.subr.mxu0 0.0
        %531 = vmatpush1.msra.mxu0 0.0
        %532 = vmatprep.subr.mxu0 0.0
        %533 = vmatpush1.msra.mxu0 0.0
        %534 = vmatprep.subr.mxu0 0.0
        %535 = vmatpush1.msra.mxu0 0.0
        %536 = vmatprep.subr.mxu0 0.0
        %537 = vmatpush1.msra.mxu0 0.0
        %538 = vmatprep.subr.mxu0 0.0
        %539 = vmatpush1.msra.mxu0 0.0
        %540 = vmatprep.subr.mxu0 0.0
        %541 = vmatpush1.msra.mxu0 0.0
        %542 = vmatprep.subr.mxu0 0.0
        %543 = vmatpush1.msra.mxu0 0.0
        %544 = vmatprep.subr.mxu0 0.0
        %545 = vmatpush1.msra.mxu0 0.0
        %546 = vmatprep.subr.mxu0 0.0
        %547 = vmatpush1.msra.mxu0 0.0
        %548 = vmatprep.subr.mxu0 0.0
        %549 = vmatpush1.msra.mxu0 0.0
        %550 = vmatprep.mubr.f32.mxu0 0.0
        %551 = vmatmul.mubr.f32.gmra.mrb[0].mxu0 %v484
        %v552 = vpop.f32.mrb[0].mxu0
        %v553 = vadd.f32 0.0, %v552
        %v554 = vpop.f32.mrb[0].mxu0
        %555 = vdwg.mxu0
        %v557 = vsel %vm460, %v482, 0
        %559 = vmatprep.subr.mxu0 0.0
        %560 = vmatpush1.msra.mxu0 %v299
        %561 = vmatprep.subr.mxu0 0.0
        %562 = vmatpush1.msra.mxu0 0.0
        %563 = vmatprep.subr.mxu0 0.0
        %564 = vmatpush1.msra.mxu0 0.0
        %565 = vmatprep.subr.mxu0 0.0
        %566 = vmatpush1.msra.mxu0 0.0
        %567 = vmatprep.subr.mxu0 0.0
        %568 = vmatpush1.msra.mxu0 0.0
        %569 = vmatprep.subr.mxu0 0.0
        %570 = vmatpush1.msra.mxu0 0.0
        %571 = vmatprep.subr.mxu0 0.0
        %572 = vmatpush1.msra.mxu0 0.0
        %573 = vmatprep.subr.mxu0 0.0
        %574 = vmatpush1.msra.mxu0 0.0
        %575 = vmatprep.subr.mxu0 0.0
        %576 = vmatpush1.msra.mxu0 0.0
        %577 = vmatprep.subr.mxu0 0.0
        %578 = vmatpush1.msra.mxu0 0.0
        %579 = vmatprep.subr.mxu0 0.0
        %580 = vmatpush1.msra.mxu0 0.0
        %581 = vmatprep.subr.mxu0 0.0
        %582 = vmatpush1.msra.mxu0 0.0
        %583 = vmatprep.subr.mxu0 0.0
        %584 = vmatpush1.msra.mxu0 0.0
        %585 = vmatprep.subr.mxu0 0.0
        %586 = vmatpush1.msra.mxu0 0.0
        %587 = vmatprep.subr.mxu0 0.0
        %588 = vmatpush1.msra.mxu0 0.0
        %589 = vmatprep.subr.mxu0 0.0
        %590 = vmatpush1.msra.mxu0 0.0
        %591 = vmatprep.subr.mxu0 0.0
        %592 = vmatpush1.msra.mxu0 0.0
        %593 = vmatprep.subr.mxu0 0.0
        %594 = vmatpush1.msra.mxu0 0.0
        %595 = vmatprep.subr.mxu0 0.0
        %596 = vmatpush1.msra.mxu0 0.0
        %597 = vmatprep.subr.mxu0 0.0
        %598 = vmatpush1.msra.mxu0 0.0
        %599 = vmatprep.subr.mxu0 0.0
        %600 = vmatpush1.msra.mxu0 0.0
        %601 = vmatprep.subr.mxu0 0.0
        %602 = vmatpush1.msra.mxu0 0.0
        %603 = vmatprep.subr.mxu0 0.0
        %604 = vmatpush1.msra.mxu0 0.0
        %605 = vmatprep.subr.mxu0 0.0
        %606 = vmatpush1.msra.mxu0 0.0
        %607 = vmatprep.subr.mxu0 0.0
        %608 = vmatpush1.msra.mxu0 0.0
        %609 = vmatprep.subr.mxu0 0.0
        %610 = vmatpush1.msra.mxu0 0.0
        %611 = vmatprep.subr.mxu0 0.0
        %612 = vmatpush1.msra.mxu0 0.0
        %613 = vmatprep.subr.mxu0 0.0
        %614 = vmatpush1.msra.mxu0 0.0
        %615 = vmatprep.subr.mxu0 0.0
        %616 = vmatpush1.msra.mxu0 0.0
        %617 = vmatprep.subr.mxu0 0.0
        %618 = vmatpush1.msra.mxu0 0.0
        %619 = vmatprep.subr.mxu0 0.0
        %620 = vmatpush1.msra.mxu0 0.0
        %621 = vmatprep.subr.mxu0 0.0
        %622 = vmatpush1.msra.mxu0 0.0
        %623 = vmatprep.mubr.f32.mxu0 0.0
        %624 = vmatmul.mubr.f32.gmra.mrb[0].mxu0 %v557
        %v625 = vpop.f32.mrb[0].mxu0
        %v626 = vadd.f32 0.0, %v625
        %v627 = vpop.f32.mrb[0].mxu0
        %628 = vdwg.mxu0
        %629 = vrot.lane.b32.xlu0 %v301, 112
        %v630 = vpop.permute.xlu0 %629
        %631 = vrot.lane.b32.xlu0 %v291, 48
        %v632 = vpop.permute.xlu0 %631
        %v633 = vsel %vm306, %v630, 0
        %v635 = vsel %vm306, %v632, 0
        %637 = vmatprep.subr.mxu0 0.0
        %638 = vmatpush1.xpose.msra.mxu0 %v635
        %639 = vmatprep.subr.mxu0 0.0
        %640 = vmatpush1.xpose.msra.mxu0 0.0
        %641 = vmatprep.subr.mxu0 0.0
        %642 = vmatpush1.xpose.msra.mxu0 0.0
        %643 = vmatprep.subr.mxu0 0.0
        %644 = vmatpush1.xpose.msra.mxu0 0.0
        %645 = vmatprep.subr.mxu0 0.0
        %646 = vmatpush1.xpose.msra.mxu0 0.0
        %647 = vmatprep.subr.mxu0 0.0
        %648 = vmatpush1.xpose.msra.mxu0 0.0
        %649 = vmatprep.subr.mxu0 0.0
        %650 = vmatpush1.xpose.msra.mxu0 0.0
        %651 = vmatprep.subr.mxu0 0.0
        %652 = vmatpush1.xpose.msra.mxu0 0.0
        %653 = vmatprep.subr.mxu0 0.0
        %654 = vmatpush1.xpose.msra.mxu0 0.0
        %655 = vmatprep.subr.mxu0 0.0
        %656 = vmatpush1.xpose.msra.mxu0 0.0
        %657 = vmatprep.subr.mxu0 0.0
        %658 = vmatpush1.xpose.msra.mxu0 0.0
        %659 = vmatprep.subr.mxu0 0.0
        %660 = vmatpush1.xpose.msra.mxu0 0.0
        %661 = vmatprep.subr.mxu0 0.0
        %662 = vmatpush1.xpose.msra.mxu0 0.0
        %663 = vmatprep.subr.mxu0 0.0
        %664 = vmatpush1.xpose.msra.mxu0 0.0
        %665 = vmatprep.subr.mxu0 0.0
        %666 = vmatpush1.xpose.msra.mxu0 0.0
        %667 = vmatprep.subr.mxu0 0.0
        %668 = vmatpush1.xpose.msra.mxu0 0.0
        %669 = vmatprep.subr.mxu0 0.0
        %670 = vmatpush1.xpose.msra.mxu0 0.0
        %671 = vmatprep.subr.mxu0 0.0
        %672 = vmatpush1.xpose.msra.mxu0 0.0
        %673 = vmatprep.subr.mxu0 0.0
        %674 = vmatpush1.xpose.msra.mxu0 0.0
        %675 = vmatprep.subr.mxu0 0.0
        %676 = vmatpush1.xpose.msra.mxu0 0.0
        %677 = vmatprep.subr.mxu0 0.0
        %678 = vmatpush1.xpose.msra.mxu0 0.0
        %679 = vmatprep.subr.mxu0 0.0
        %680 = vmatpush1.xpose.msra.mxu0 0.0
        %681 = vmatprep.subr.mxu0 0.0
        %682 = vmatpush1.xpose.msra.mxu0 0.0
        %683 = vmatprep.subr.mxu0 0.0
        %684 = vmatpush1.xpose.msra.mxu0 0.0
        %685 = vmatprep.subr.mxu0 0.0
        %686 = vmatpush1.xpose.msra.mxu0 0.0
        %687 = vmatprep.subr.mxu0 0.0
        %688 = vmatpush1.xpose.msra.mxu0 0.0
        %689 = vmatprep.subr.mxu0 0.0
        %690 = vmatpush1.xpose.msra.mxu0 0.0
        %691 = vmatprep.subr.mxu0 0.0
        %692 = vmatpush1.xpose.msra.mxu0 0.0
        %693 = vmatprep.subr.mxu0 0.0
        %694 = vmatpush1.xpose.msra.mxu0 0.0
        %695 = vmatprep.subr.mxu0 0.0
        %696 = vmatpush1.xpose.msra.mxu0 0.0
        %697 = vmatprep.subr.mxu0 0.0
        %698 = vmatpush1.xpose.msra.mxu0 0.0
        %699 = vmatprep.subr.mxu0 0.0
        %700 = vmatpush1.xpose.msra.mxu0 0.0
        %701 = vmatprep.mubr.f32.mxu0 0.0
        %702 = vmatmul.mubr.f32.gmra.mrb[0].mxu0 %v633
        %v703 = vpop.f32.mrb[0].mxu0
        %v704 = vadd.f32 0.0, %v703
        %v705 = vpop.f32.mrb[0].mxu0
        %706 = vdwg.mxu0
        %707 = vrot.lane.b32.xlu0 %v302, 112
        %v708 = vpop.permute.xlu0 %707
        %709 = vrot.lane.b32.xlu0 %v297, 48
        %v710 = vpop.permute.xlu0 %709
        %v711 = vsel %vm306, %v708, 0
        %v713 = vsel %vm306, %v710, 0
        %715 = vmatprep.subr.mxu0 0.0
        %716 = vmatpush1.xpose.msra.mxu0 %v713
        %717 = vmatprep.subr.mxu0 0.0
        %718 = vmatpush1.xpose.msra.mxu0 0.0
        %719 = vmatprep.subr.mxu0 0.0
        %720 = vmatpush1.xpose.msra.mxu0 0.0
        %721 = vmatprep.subr.mxu0 0.0
        %722 = vmatpush1.xpose.msra.mxu0 0.0
        %723 = vmatprep.subr.mxu0 0.0
        %724 = vmatpush1.xpose.msra.mxu0 0.0
        %725 = vmatprep.subr.mxu0 0.0
        %726 = vmatpush1.xpose.msra.mxu0 0.0
        %727 = vmatprep.subr.mxu0 0.0
        %728 = vmatpush1.xpose.msra.mxu0 0.0
        %729 = vmatprep.subr.mxu0 0.0
        %730 = vmatpush1.xpose.msra.mxu0 0.0
        %731 = vmatprep.subr.mxu0 0.0
        %732 = vmatpush1.xpose.msra.mxu0 0.0
        %733 = vmatprep.subr.mxu0 0.0
        %734 = vmatpush1.xpose.msra.mxu0 0.0
        %735 = vmatprep.subr.mxu0 0.0
        %736 = vmatpush1.xpose.msra.mxu0 0.0
        %737 = vmatprep.subr.mxu0 0.0
        %738 = vmatpush1.xpose.msra.mxu0 0.0
        %739 = vmatprep.subr.mxu0 0.0
        %740 = vmatpush1.xpose.msra.mxu0 0.0
        %741 = vmatprep.subr.mxu0 0.0
        %742 = vmatpush1.xpose.msra.mxu0 0.0
        %743 = vmatprep.subr.mxu0 0.0
        %744 = vmatpush1.xpose.msra.mxu0 0.0
        %745 = vmatprep.subr.mxu0 0.0
        %746 = vmatpush1.xpose.msra.mxu0 0.0
        %747 = vmatprep.subr.mxu0 0.0
        %748 = vmatpush1.xpose.msra.mxu0 0.0
        %749 = vmatprep.subr.mxu0 0.0
        %750 = vmatpush1.xpose.msra.mxu0 0.0
        %751 = vmatprep.subr.mxu0 0.0
        %752 = vmatpush1.xpose.msra.mxu0 0.0
        %753 = vmatprep.subr.mxu0 0.0
        %754 = vmatpush1.xpose.msra.mxu0 0.0
        %755 = vmatprep.subr.mxu0 0.0
        %756 = vmatpush1.xpose.msra.mxu0 0.0
        %757 = vmatprep.subr.mxu0 0.0
        %758 = vmatpush1.xpose.msra.mxu0 0.0
        %759 = vmatprep.subr.mxu0 0.0
        %760 = vmatpush1.xpose.msra.mxu0 0.0
        %761 = vmatprep.subr.mxu0 0.0
        %762 = vmatpush1.xpose.msra.mxu0 0.0
        %763 = vmatprep.subr.mxu0 0.0
        %764 = vmatpush1.xpose.msra.mxu0 0.0
        %765 = vmatprep.subr.mxu0 0.0
        %766 = vmatpush1.xpose.msra.mxu0 0.0
        %767 = vmatprep.subr.mxu0 0.0
        %768 = vmatpush1.xpose.msra.mxu0 0.0
        %769 = vmatprep.subr.mxu0 0.0
        %770 = vmatpush1.xpose.msra.mxu0 0.0
        %771 = vmatprep.subr.mxu0 0.0
        %772 = vmatpush1.xpose.msra.mxu0 0.0
        %773 = vmatprep.subr.mxu0 0.0
        %774 = vmatpush1.xpose.msra.mxu0 0.0
        %775 = vmatprep.subr.mxu0 0.0
        %776 = vmatpush1.xpose.msra.mxu0 0.0
        %777 = vmatprep.subr.mxu0 0.0
        %778 = vmatpush1.xpose.msra.mxu0 0.0
        %779 = vmatprep.mubr.f32.mxu0 0.0
        %780 = vmatmul.mubr.f32.gmra.mrb[0].mxu0 %v711
        %v781 = vpop.f32.mrb[0].mxu0
        %v782 = vadd.f32 0.0, %v781
        %v783 = vpop.f32.mrb[0].mxu0
        %784 = vdwg.mxu0
        %v785 = vsel %vm460, %v704, -inf
        %786 = vmax.xlane.f32.xlu0 %v785
        %v787 = vpop.xlane.xlu0 %786
        %v788 = vsel %vm460, %v782, -inf
        %789 = vmax.xlane.f32.xlu0 %v788
        %v790 = vpop.xlane.xlu0 %789
        %v791 = vsub.f32 %v704, %v787
        %v792 = vsub.f32 %v782, %v790
        %v793 = vmul.f32 %v791, 1.442695
        %v794 = vpow.pop %v793
        %v795 = vmul.f32 %v792, 1.442695
        %v796 = vpow.pop %v795
        %v797 = vsel %vm460, %v794, 0.0
        %798 = vadd.xlane.f32.xlu0 %v797
        %v799 = vpop.xlane.xlu0 %798
        %v800 = vsel %vm460, %v796, 0.0
        %801 = vadd.xlane.f32.xlu0 %v800
        %v802 = vpop.xlane.xlu0 %801
        %v803 = vrcp.pop %v799
        %v804 = vrcp.pop %v802
        %v805 = vmul.f32 %v794, %v803
        %v806 = vmul.f32 %v796, %v804
        %808 = vrot.lane.b32.xlu0 %v293, 112
        %v809 = vpop.permute.xlu0 %808
        %v812 = vsel %vm460, %v805, 0
        %814 = vmatprep.subr.mxu0 0.0
        %815 = vmatpush1.msra.mxu0 %v809
        %816 = vmatprep.subr.mxu0 0.0
        %817 = vmatpush1.msra.mxu0 0.0
        %818 = vmatprep.subr.mxu0 0.0
        %819 = vmatpush1.msra.mxu0 0.0
        %820 = vmatprep.subr.mxu0 0.0
        %821 = vmatpush1.msra.mxu0 0.0
        %822 = vmatprep.subr.mxu0 0.0
        %823 = vmatpush1.msra.mxu0 0.0
        %824 = vmatprep.subr.mxu0 0.0
        %825 = vmatpush1.msra.mxu0 0.0
        %826 = vmatprep.subr.mxu0 0.0
        %827 = vmatpush1.msra.mxu0 0.0
        %828 = vmatprep.subr.mxu0 0.0
        %829 = vmatpush1.msra.mxu0 0.0
        %830 = vmatprep.subr.mxu0 0.0
        %831 = vmatpush1.msra.mxu0 0.0
        %832 = vmatprep.subr.mxu0 0.0
        %833 = vmatpush1.msra.mxu0 0.0
        %834 = vmatprep.subr.mxu0 0.0
        %835 = vmatpush1.msra.mxu0 0.0
        %836 = vmatprep.subr.mxu0 0.0
        %837 = vmatpush1.msra.mxu0 0.0
        %838 = vmatprep.subr.mxu0 0.0
        %839 = vmatpush1.msra.mxu0 0.0
        %840 = vmatprep.subr.mxu0 0.0
        %841 = vmatpush1.msra.mxu0 0.0
        %842 = vmatprep.subr.mxu0 0.0
        %843 = vmatpush1.msra.mxu0 0.0
        %844 = vmatprep.subr.mxu0 0.0
        %845 = vmatpush1.msra.mxu0 0.0
        %846 = vmatprep.subr.mxu0 0.0
        %847 = vmatpush1.msra.mxu0 0.0
        %848 = vmatprep.subr.mxu0 0.0
        %849 = vmatpush1.msra.mxu0 0.0
        %850 = vmatprep.subr.mxu0 0.0
        %851 = vmatpush1.msra.mxu0 0.0
        %852 = vmatprep.subr.mxu0 0.0
        %853 = vmatpush1.msra.mxu0 0.0
        %854 = vmatprep.subr.mxu0 0.0
        %855 = vmatpush1.msra.mxu0 0.0
        %856 = vmatprep.subr.mxu0 0.0
        %857 = vmatpush1.msra.mxu0 0.0
        %858 = vmatprep.subr.mxu0 0.0
        %859 = vmatpush1.msra.mxu0 0.0
        %860 = vmatprep.subr.mxu0 0.0
        %861 = vmatpush1.msra.mxu0 0.0
        %862 = vmatprep.subr.mxu0 0.0
        %863 = vmatpush1.msra.mxu0 0.0
        %864 = vmatprep.subr.mxu0 0.0
        %865 = vmatpush1.msra.mxu0 0.0
        %866 = vmatprep.subr.mxu0 0.0
        %867 = vmatpush1.msra.mxu0 0.0
        %868 = vmatprep.subr.mxu0 0.0
        %869 = vmatpush1.msra.mxu0 0.0
        %870 = vmatprep.subr.mxu0 0.0
        %871 = vmatpush1.msra.mxu0 0.0
        %872 = vmatprep.subr.mxu0 0.0
        %873 = vmatpush1.msra.mxu0 0.0
        %874 = vmatprep.subr.mxu0 0.0
        %875 = vmatpush1.msra.mxu0 0.0
        %876 = vmatprep.subr.mxu0 0.0
        %877 = vmatpush1.msra.mxu0 0.0
        %878 = vmatprep.mubr.f32.mxu0 0.0
        %879 = vmatmul.mubr.f32.gmra.mrb[0].mxu0 %v812
        %v880 = vpop.f32.mrb[0].mxu0
        %v881 = vadd.f32 0.0, %v880
        %v882 = vpop.f32.mrb[0].mxu0
        %883 = vdwg.mxu0
        %885 = vrot.lane.b32.xlu0 %v299, 112
        %v886 = vpop.permute.xlu0 %885
        %v889 = vsel %vm460, %v806, 0
        %891 = vmatprep.subr.mxu0 0.0
        %892 = vmatpush1.msra.mxu0 %v886
        %893 = vmatprep.subr.mxu0 0.0
        %894 = vmatpush1.msra.mxu0 0.0
        %895 = vmatprep.subr.mxu0 0.0
        %896 = vmatpush1.msra.mxu0 0.0
        %897 = vmatprep.subr.mxu0 0.0
        %898 = vmatpush1.msra.mxu0 0.0
        %899 = vmatprep.subr.mxu0 0.0
        %900 = vmatpush1.msra.mxu0 0.0
        %901 = vmatprep.subr.mxu0 0.0
        %902 = vmatpush1.msra.mxu0 0.0
        %903 = vmatprep.subr.mxu0 0.0
        %904 = vmatpush1.msra.mxu0 0.0
        %905 = vmatprep.subr.mxu0 0.0
        %906 = vmatpush1.msra.mxu0 0.0
        %907 = vmatprep.subr.mxu0 0.0
        %908 = vmatpush1.msra.mxu0 0.0
        %909 = vmatprep.subr.mxu0 0.0
        %910 = vmatpush1.msra.mxu0 0.0
        %911 = vmatprep.subr.mxu0 0.0
        %912 = vmatpush1.msra.mxu0 0.0
        %913 = vmatprep.subr.mxu0 0.0
        %914 = vmatpush1.msra.mxu0 0.0
        %915 = vmatprep.subr.mxu0 0.0
        %916 = vmatpush1.msra.mxu0 0.0
        %917 = vmatprep.subr.mxu0 0.0
        %918 = vmatpush1.msra.mxu0 0.0
        %919 = vmatprep.subr.mxu0 0.0
        %920 = vmatpush1.msra.mxu0 0.0
        %921 = vmatprep.subr.mxu0 0.0
        %922 = vmatpush1.msra.mxu0 0.0
        %923 = vmatprep.subr.mxu0 0.0
        %924 = vmatpush1.msra.mxu0 0.0
        %925 = vmatprep.subr.mxu0 0.0
        %926 = vmatpush1.msra.mxu0 0.0
        %927 = vmatprep.subr.mxu0 0.0
        %928 = vmatpush1.msra.mxu0 0.0
        %929 = vmatprep.subr.mxu0 0.0
        %930 = vmatpush1.msra.mxu0 0.0
        %931 = vmatprep.subr.mxu0 0.0
        %932 = vmatpush1.msra.mxu0 0.0
        %933 = vmatprep.subr.mxu0 0.0
        %934 = vmatpush1.msra.mxu0 0.0
        %935 = vmatprep.subr.mxu0 0.0
        %936 = vmatpush1.msra.mxu0 0.0
        %937 = vmatprep.subr.mxu0 0.0
        %938 = vmatpush1.msra.mxu0 0.0
        %939 = vmatprep.subr.mxu0 0.0
        %940 = vmatpush1.msra.mxu0 0.0
        %941 = vmatprep.subr.mxu0 0.0
        %942 = vmatpush1.msra.mxu0 0.0
        %943 = vmatprep.subr.mxu0 0.0
        %944 = vmatpush1.msra.mxu0 0.0
        %945 = vmatprep.subr.mxu0 0.0
        %946 = vmatpush1.msra.mxu0 0.0
        %947 = vmatprep.subr.mxu0 0.0
        %948 = vmatpush1.msra.mxu0 0.0
        %949 = vmatprep.subr.mxu0 0.0
        %950 = vmatpush1.msra.mxu0 0.0
        %951 = vmatprep.subr.mxu0 0.0
        %952 = vmatpush1.msra.mxu0 0.0
        %953 = vmatprep.subr.mxu0 0.0
        %954 = vmatpush1.msra.mxu0 0.0
        %955 = vmatprep.mubr.f32.mxu0 0.0
        %956 = vmatmul.mubr.f32.gmra.mrb[0].mxu0 %v889
        %v957 = vpop.f32.mrb[0].mxu0
        %v958 = vadd.f32 0.0, %v957
        %v959 = vpop.f32.mrb[0].mxu0
        %960 = vdwg.mxu0
        %v962 = vsel %vm306, %v881, 0
        %v965 = vsel %vm306, %v958, 0
        %967 = vmatprep.subr.mxu0 0.0
        %968 = vmatpush1.msra.mxu0 %v211
        %969 = vmatprep.subr.mxu0 0.0
        %970 = vmatpush1.msra.mxu0 %v212
        %971 = vmatprep.subr.mxu0 0.0
        %972 = vmatpush1.msra.mxu0 0.0
        %973 = vmatprep.subr.mxu0 0.0
        %974 = vmatpush1.msra.mxu0 0.0
        %975 = vmatprep.subr.mxu0 0.0
        %976 = vmatpush1.msra.mxu0 0.0
        %977 = vmatprep.subr.mxu0 0.0
        %978 = vmatpush1.msra.mxu0 0.0
        %979 = vmatprep.subr.mxu0 0.0
        %980 = vmatpush1.msra.mxu0 0.0
        %981 = vmatprep.subr.mxu0 0.0
        %982 = vmatpush1.msra.mxu0 0.0
        %983 = vmatprep.subr.mxu0 0.0
        %984 = vmatpush1.msra.mxu0 0.0
        %985 = vmatprep.subr.mxu0 0.0
        %986 = vmatpush1.msra.mxu0 0.0
        %987 = vmatprep.subr.mxu0 0.0
        %988 = vmatpush1.msra.mxu0 0.0
        %989 = vmatprep.subr.mxu0 0.0
        %990 = vmatpush1.msra.mxu0 0.0
        %991 = vmatprep.subr.mxu0 0.0
        %992 = vmatpush1.msra.mxu0 0.0
        %993 = vmatprep.subr.mxu0 0.0
        %994 = vmatpush1.msra.mxu0 0.0
        %995 = vmatprep.subr.mxu0 0.0
        %996 = vmatpush1.msra.mxu0 0.0
        %997 = vmatprep.subr.mxu0 0.0
        %998 = vmatpush1.msra.mxu0 0.0
        %999 = vmatprep.subr.mxu0 0.0
        %1000 = vmatpush1.msra.mxu0 0.0
        %1001 = vmatprep.subr.mxu0 0.0
        %1002 = vmatpush1.msra.mxu0 0.0
        %1003 = vmatprep.subr.mxu0 0.0
        %1004 = vmatpush1.msra.mxu0 0.0
        %1005 = vmatprep.subr.mxu0 0.0
        %1006 = vmatpush1.msra.mxu0 0.0
        %1007 = vmatprep.subr.mxu0 0.0
        %1008 = vmatpush1.msra.mxu0 0.0
        %1009 = vmatprep.subr.mxu0 0.0
        %1010 = vmatpush1.msra.mxu0 0.0
        %1011 = vmatprep.subr.mxu0 0.0
        %1012 = vmatpush1.msra.mxu0 0.0
        %1013 = vmatprep.subr.mxu0 0.0
        %1014 = vmatpush1.msra.mxu0 0.0
        %1015 = vmatprep.subr.mxu0 0.0
        %1016 = vmatpush1.msra.mxu0 0.0
        %1017 = vmatprep.subr.mxu0 0.0
        %1018 = vmatpush1.msra.mxu0 0.0
        %1019 = vmatprep.subr.mxu0 0.0
        %1020 = vmatpush1.msra.mxu0 0.0
        %1021 = vmatprep.subr.mxu0 0.0
        %1022 = vmatpush1.msra.mxu0 0.0
        %1023 = vmatprep.subr.mxu0 0.0
        %1024 = vmatpush1.msra.mxu0 0.0
        %1025 = vmatprep.subr.mxu0 0.0
        %1026 = vmatpush1.msra.mxu0 0.0
        %1027 = vmatprep.subr.mxu0 0.0
        %1028 = vmatpush1.msra.mxu0 0.0
        %1029 = vmatprep.subr.mxu0 0.0
        %1030 = vmatpush1.msra.mxu0 0.0
        %1031 = vmatprep.mubr.f32.mxu0 0.0
        %1032 = vmatmul.mubr.f32.gmra.mrb[0].mxu0 %v962
        %v1033 = vpop.f32.mrb[0].mxu0
        %v1034 = vadd.f32 0.0, %v1033
        %v1035 = vpop.f32.mrb[0].mxu0
        %1036 = vmatprep.mubr.f32.mxu0 0.0
        %1037 = vmatmul.mubr.f32.gmra.mrb[0].mxu0 %v965
        %v1038 = vpop.f32.mrb[0].mxu0
        %v1039 = vadd.f32 0.0, %v1038
        %v1040 = vpop.f32.mrb[0].mxu0
        %1041 = vdwg.mxu0
        %v1043 = vsel %vm306, %v553, 0
        %v1046 = vsel %vm306, %v626, 0
        %1048 = vmatprep.subr.mxu0 0.0
        %1049 = vmatpush1.msra.mxu0 %v209
        %1050 = vmatprep.subr.mxu0 0.0
        %1051 = vmatpush1.msra.mxu0 %v210
        %1052 = vmatprep.subr.mxu0 0.0
        %1053 = vmatpush1.msra.mxu0 0.0
        %1054 = vmatprep.subr.mxu0 0.0
        %1055 = vmatpush1.msra.mxu0 0.0
        %1056 = vmatprep.subr.mxu0 0.0
        %1057 = vmatpush1.msra.mxu0 0.0
        %1058 = vmatprep.subr.mxu0 0.0
        %1059 = vmatpush1.msra.mxu0 0.0
        %1060 = vmatprep.subr.mxu0 0.0
        %1061 = vmatpush1.msra.mxu0 0.0
        %1062 = vmatprep.subr.mxu0 0.0
        %1063 = vmatpush1.msra.mxu0 0.0
        %1064 = vmatprep.subr.mxu0 0.0
        %1065 = vmatpush1.msra.mxu0 0.0
        %1066 = vmatprep.subr.mxu0 0.0
        %1067 = vmatpush1.msra.mxu0 0.0
        %1068 = vmatprep.subr.mxu0 0.0
        %1069 = vmatpush1.msra.mxu0 0.0
        %1070 = vmatprep.subr.mxu0 0.0
        %1071 = vmatpush1.msra.mxu0 0.0
        %1072 = vmatprep.subr.mxu0 0.0
        %1073 = vmatpush1.msra.mxu0 0.0
        %1074 = vmatprep.subr.mxu0 0.0
        %1075 = vmatpush1.msra.mxu0 0.0
        %1076 = vmatprep.subr.mxu0 0.0
        %1077 = vmatpush1.msra.mxu0 0.0
        %1078 = vmatprep.subr.mxu0 0.0
        %1079 = vmatpush1.msra.mxu0 0.0
        %1080 = vmatprep.subr.mxu0 0.0
        %1081 = vmatpush1.msra.mxu0 0.0
        %1082 = vmatprep.subr.mxu0 0.0
        %1083 = vmatpush1.msra.mxu0 0.0
        %1084 = vmatprep.subr.mxu0 0.0
        %1085 = vmatpush1.msra.mxu0 0.0
        %1086 = vmatprep.subr.mxu0 0.0
        %1087 = vmatpush1.msra.mxu0 0.0
        %1088 = vmatprep.subr.mxu0 0.0
        %1089 = vmatpush1.msra.mxu0 0.0
        %1090 = vmatprep.subr.mxu0 0.0
        %1091 = vmatpush1.msra.mxu0 0.0
        %1092 = vmatprep.subr.mxu0 0.0
        %1093 = vmatpush1.msra.mxu0 0.0
        %1094 = vmatprep.subr.mxu0 0.0
        %1095 = vmatpush1.msra.mxu0 0.0
        %1096 = vmatprep.subr.mxu0 0.0
        %1097 = vmatpush1.msra.mxu0 0.0
        %1098 = vmatprep.subr.mxu0 0.0
        %1099 = vmatpush1.msra.mxu0 0.0
        %1100 = vmatprep.subr.mxu0 0.0
        %1101 = vmatpush1.msra.mxu0 0.0
        %1102 = vmatprep.subr.mxu0 0.0
        %1103 = vmatpush1.msra.mxu0 0.0
        %1104 = vmatprep.subr.mxu0 0.0
        %1105 = vmatpush1.msra.mxu0 0.0
        %1106 = vmatprep.subr.mxu0 0.0
        %1107 = vmatpush1.msra.mxu0 0.0
        %1108 = vmatprep.subr.mxu0 0.0
        %1109 = vmatpush1.msra.mxu0 0.0
        %1110 = vmatprep.subr.mxu0 0.0
        %1111 = vmatpush1.msra.mxu0 0.0
        %1112 = vmatprep.mubr.f32.mxu0 0.0
        %1113 = vmatmul.mubr.f32.gmra.mrb[0].mxu0 %v1043
        %v1114 = vpop.f32.mrb[0].mxu0
        %v1115 = vadd.f32 %v1034, %v1114
        %v1116 = vpop.f32.mrb[0].mxu0
        %1117 = vmatprep.mubr.f32.mxu0 0.0
        %1118 = vmatmul.mubr.f32.gmra.mrb[0].mxu0 %v1046
        %v1119 = vpop.f32.mrb[0].mxu0
        %v1120 = vadd.f32 %v1039, %v1119
        %v1121 = vpop.f32.mrb[0].mxu0
        %1122 = vdwg.mxu0
        %1123 = vrot.lane.b32.xlu0 %v301, 96
        %v1124 = vpop.permute.xlu0 %1123
        %1125 = vrot.lane.b32.xlu0 %v291, 32
        %v1126 = vpop.permute.xlu0 %1125
        %v1127 = vsel %vm306, %v1124, 0
        %v1129 = vsel %vm306, %v1126, 0
        %1131 = vmatprep.subr.mxu0 0.0
        %1132 = vmatpush1.xpose.msra.mxu0 %v1129
        %1133 = vmatprep.subr.mxu0 0.0
        %1134 = vmatpush1.xpose.msra.mxu0 0.0
        %1135 = vmatprep.subr.mxu0 0.0
        %1136 = vmatpush1.xpose.msra.mxu0 0.0
        %1137 = vmatprep.subr.mxu0 0.0
        %1138 = vmatpush1.xpose.msra.mxu0 0.0
        %1139 = vmatprep.subr.mxu0 0.0
        %1140 = vmatpush1.xpose.msra.mxu0 0.0
        %1141 = vmatprep.subr.mxu0 0.0
        %1142 = vmatpush1.xpose.msra.mxu0 0.0
        %1143 = vmatprep.subr.mxu0 0.0
        %1144 = vmatpush1.xpose.msra.mxu0 0.0
        %1145 = vmatprep.subr.mxu0 0.0
        %1146 = vmatpush1.xpose.msra.mxu0 0.0
        %1147 = vmatprep.subr.mxu0 0.0
        %1148 = vmatpush1.xpose.msra.mxu0 0.0
        %1149 = vmatprep.subr.mxu0 0.0
        %1150 = vmatpush1.xpose.msra.mxu0 0.0
        %1151 = vmatprep.subr.mxu0 0.0
        %1152 = vmatpush1.xpose.msra.mxu0 0.0
        %1153 = vmatprep.subr.mxu0 0.0
        %1154 = vmatpush1.xpose.msra.mxu0 0.0
        %1155 = vmatprep.subr.mxu0 0.0
        %1156 = vmatpush1.xpose.msra.mxu0 0.0
        %1157 = vmatprep.subr.mxu0 0.0
        %1158 = vmatpush1.xpose.msra.mxu0 0.0
        %1159 = vmatprep.subr.mxu0 0.0
        %1160 = vmatpush1.xpose.msra.mxu0 0.0
        %1161 = vmatprep.subr.mxu0 0.0
        %1162 = vmatpush1.xpose.msra.mxu0 0.0
        %1163 = vmatprep.subr.mxu0 0.0
        %1164 = vmatpush1.xpose.msra.mxu0 0.0
        %1165 = vmatprep.subr.mxu0 0.0
        %1166 = vmatpush1.xpose.msra.mxu0 0.0
        %1167 = vmatprep.subr.mxu0 0.0
        %1168 = vmatpush1.xpose.msra.mxu0 0.0
        %1169 = vmatprep.subr.mxu0 0.0
        %1170 = vmatpush1.xpose.msra.mxu0 0.0
        %1171 = vmatprep.subr.mxu0 0.0
        %1172 = vmatpush1.xpose.msra.mxu0 0.0
        %1173 = vmatprep.subr.mxu0 0.0
        %1174 = vmatpush1.xpose.msra.mxu0 0.0
        %1175 = vmatprep.subr.mxu0 0.0
        %1176 = vmatpush1.xpose.msra.mxu0 0.0
        %1177 = vmatprep.subr.mxu0 0.0
        %1178 = vmatpush1.xpose.msra.mxu0 0.0
        %1179 = vmatprep.subr.mxu0 0.0
        %1180 = vmatpush1.xpose.msra.mxu0 0.0
        %1181 = vmatprep.subr.mxu0 0.0
        %1182 = vmatpush1.xpose.msra.mxu0 0.0
        %1183 = vmatprep.subr.mxu0 0.0
        %1184 = vmatpush1.xpose.msra.mxu0 0.0
        %1185 = vmatprep.subr.mxu0 0.0
        %1186 = vmatpush1.xpose.msra.mxu0 0.0
        %1187 = vmatprep.subr.mxu0 0.0
        %1188 = vmatpush1.xpose.msra.mxu0 0.0
        %1189 = vmatprep.subr.mxu0 0.0
        %1190 = vmatpush1.xpose.msra.mxu0 0.0
        %1191 = vmatprep.subr.mxu0 0.0
        %1192 = vmatpush1.xpose.msra.mxu0 0.0
        %1193 = vmatprep.subr.mxu0 0.0
        %1194 = vmatpush1.xpose.msra.mxu0 0.0
        %1195 = vmatprep.mubr.f32.mxu0 0.0
        %1196 = vmatmul.mubr.f32.gmra.mrb[0].mxu0 %v1127
        %v1197 = vpop.f32.mrb[0].mxu0
        %v1198 = vadd.f32 0.0, %v1197
        %v1199 = vpop.f32.mrb[0].mxu0
        %1200 = vdwg.mxu0
        %1201 = vrot.lane.b32.xlu0 %v302, 96
        %v1202 = vpop.permute.xlu0 %1201
        %1203 = vrot.lane.b32.xlu0 %v297, 32
        %v1204 = vpop.permute.xlu0 %1203
        %v1205 = vsel %vm306, %v1202, 0
        %v1207 = vsel %vm306, %v1204, 0
        %1209 = vmatprep.subr.mxu0 0.0
        %1210 = vmatpush1.xpose.msra.mxu0 %v1207
        %1211 = vmatprep.subr.mxu0 0.0
        %1212 = vmatpush1.xpose.msra.mxu0 0.0
        %1213 = vmatprep.subr.mxu0 0.0
        %1214 = vmatpush1.xpose.msra.mxu0 0.0
        %1215 = vmatprep.subr.mxu0 0.0
        %1216 = vmatpush1.xpose.msra.mxu0 0.0
        %1217 = vmatprep.subr.mxu0 0.0
        %1218 = vmatpush1.xpose.msra.mxu0 0.0
        %1219 = vmatprep.subr.mxu0 0.0
        %1220 = vmatpush1.xpose.msra.mxu0 0.0
        %1221 = vmatprep.subr.mxu0 0.0
        %1222 = vmatpush1.xpose.msra.mxu0 0.0
        %1223 = vmatprep.subr.mxu0 0.0
        %1224 = vmatpush1.xpose.msra.mxu0 0.0
        %1225 = vmatprep.subr.mxu0 0.0
        %1226 = vmatpush1.xpose.msra.mxu0 0.0
        %1227 = vmatprep.subr.mxu0 0.0
        %1228 = vmatpush1.xpose.msra.mxu0 0.0
        %1229 = vmatprep.subr.mxu0 0.0
        %1230 = vmatpush1.xpose.msra.mxu0 0.0
        %1231 = vmatprep.subr.mxu0 0.0
        %1232 = vmatpush1.xpose.msra.mxu0 0.0
        %1233 = vmatprep.subr.mxu0 0.0
        %1234 = vmatpush1.xpose.msra.mxu0 0.0
        %1235 = vmatprep.subr.mxu0 0.0
        %1236 = vmatpush1.xpose.msra.mxu0 0.0
        %1237 = vmatprep.subr.mxu0 0.0
        %1238 = vmatpush1.xpose.msra.mxu0 0.0
        %1239 = vmatprep.subr.mxu0 0.0
        %1240 = vmatpush1.xpose.msra.mxu0 0.0
        %1241 = vmatprep.subr.mxu0 0.0
        %1242 = vmatpush1.xpose.msra.mxu0 0.0
        %1243 = vmatprep.subr.mxu0 0.0
        %1244 = vmatpush1.xpose.msra.mxu0 0.0
        %1245 = vmatprep.subr.mxu0 0.0
        %1246 = vmatpush1.xpose.msra.mxu0 0.0
        %1247 = vmatprep.subr.mxu0 0.0
        %1248 = vmatpush1.xpose.msra.mxu0 0.0
        %1249 = vmatprep.subr.mxu0 0.0
        %1250 = vmatpush1.xpose.msra.mxu0 0.0
        %1251 = vmatprep.subr.mxu0 0.0
        %1252 = vmatpush1.xpose.msra.mxu0 0.0
        %1253 = vmatprep.subr.mxu0 0.0
        %1254 = vmatpush1.xpose.msra.mxu0 0.0
        %1255 = vmatprep.subr.mxu0 0.0
        %1256 = vmatpush1.xpose.msra.mxu0 0.0
        %1257 = vmatprep.subr.mxu0 0.0
        %1258 = vmatpush1.xpose.msra.mxu0 0.0
        %1259 = vmatprep.subr.mxu0 0.0
        %1260 = vmatpush1.xpose.msra.mxu0 0.0
        %1261 = vmatprep.subr.mxu0 0.0
        %1262 = vmatpush1.xpose.msra.mxu0 0.0
        %1263 = vmatprep.subr.mxu0 0.0
        %1264 = vmatpush1.xpose.msra.mxu0 0.0
        %1265 = vmatprep.subr.mxu0 0.0
        %1266 = vmatpush1.xpose.msra.mxu0 0.0
        %1267 = vmatprep.subr.mxu0 0.0
        %1268 = vmatpush1.xpose.msra.mxu0 0.0
        %1269 = vmatprep.subr.mxu0 0.0
        %1270 = vmatpush1.xpose.msra.mxu0 0.0
        %1271 = vmatprep.subr.mxu0 0.0
        %1272 = vmatpush1.xpose.msra.mxu0 0.0
        %1273 = vmatprep.mubr.f32.mxu0 0.0
        %1274 = vmatmul.mubr.f32.gmra.mrb[0].mxu0 %v1205
        %v1275 = vpop.f32.mrb[0].mxu0
        %v1276 = vadd.f32 0.0, %v1275
        %v1277 = vpop.f32.mrb[0].mxu0
        %1278 = vdwg.mxu0
        %v1279 = vsel %vm460, %v1198, -inf
        %1280 = vmax.xlane.f32.xlu0 %v1279
        %v1281 = vpop.xlane.xlu0 %1280
        %v1282 = vsel %vm460, %v1276, -inf
        %1283 = vmax.xlane.f32.xlu0 %v1282
        %v1284 = vpop.xlane.xlu0 %1283
        %v1285 = vsub.f32 %v1198, %v1281
        %v1286 = vsub.f32 %v1276, %v1284
        %v1287 = vmul.f32 %v1285, 1.442695
        %v1288 = vpow.pop %v1287
        %v1289 = vmul.f32 %v1286, 1.442695
        %v1290 = vpow.pop %v1289
        %v1291 = vsel %vm460, %v1288, 0.0
        %1292 = vadd.xlane.f32.xlu0 %v1291
        %v1293 = vpop.xlane.xlu0 %1292
        %v1294 = vsel %vm460, %v1290, 0.0
        %1295 = vadd.xlane.f32.xlu0 %v1294
        %v1296 = vpop.xlane.xlu0 %1295
        %v1297 = vrcp.pop %v1293
        %v1298 = vrcp.pop %v1296
        %v1299 = vmul.f32 %v1288, %v1297
        %v1300 = vmul.f32 %v1290, %v1298
        %1301 = vrot.lane.b32.xlu0 %v293, 96
        %v1302 = vpop.permute.xlu0 %1301
        %v1305 = vsel %vm460, %v1299, 0
        %1307 = vmatprep.subr.mxu0 0.0
        %1308 = vmatpush1.msra.mxu0 %v1302
        %1309 = vmatprep.subr.mxu0 0.0
        %1310 = vmatpush1.msra.mxu0 0.0
        %1311 = vmatprep.subr.mxu0 0.0
        %1312 = vmatpush1.msra.mxu0 0.0
        %1313 = vmatprep.subr.mxu0 0.0
        %1314 = vmatpush1.msra.mxu0 0.0
        %1315 = vmatprep.subr.mxu0 0.0
        %1316 = vmatpush1.msra.mxu0 0.0
        %1317 = vmatprep.subr.mxu0 0.0
        %1318 = vmatpush1.msra.mxu0 0.0
        %1319 = vmatprep.subr.mxu0 0.0
        %1320 = vmatpush1.msra.mxu0 0.0
        %1321 = vmatprep.subr.mxu0 0.0
        %1322 = vmatpush1.msra.mxu0 0.0
        %1323 = vmatprep.subr.mxu0 0.0
        %1324 = vmatpush1.msra.mxu0 0.0
        %1325 = vmatprep.subr.mxu0 0.0
        %1326 = vmatpush1.msra.mxu0 0.0
        %1327 = vmatprep.subr.mxu0 0.0
        %1328 = vmatpush1.msra.mxu0 0.0
        %1329 = vmatprep.subr.mxu0 0.0
        %1330 = vmatpush1.msra.mxu0 0.0
        %1331 = vmatprep.subr.mxu0 0.0
        %1332 = vmatpush1.msra.mxu0 0.0
        %1333 = vmatprep.subr.mxu0 0.0
        %1334 = vmatpush1.msra.mxu0 0.0
        %1335 = vmatprep.subr.mxu0 0.0
        %1336 = vmatpush1.msra.mxu0 0.0
        %1337 = vmatprep.subr.mxu0 0.0
        %1338 = vmatpush1.msra.mxu0 0.0
        %1339 = vmatprep.subr.mxu0 0.0
        %1340 = vmatpush1.msra.mxu0 0.0
        %1341 = vmatprep.subr.mxu0 0.0
        %1342 = vmatpush1.msra.mxu0 0.0
        %1343 = vmatprep.subr.mxu0 0.0
        %1344 = vmatpush1.msra.mxu0 0.0
        %1345 = vmatprep.subr.mxu0 0.0
        %1346 = vmatpush1.msra.mxu0 0.0
        %1347 = vmatprep.subr.mxu0 0.0
        %1348 = vmatpush1.msra.mxu0 0.0
        %1349 = vmatprep.subr.mxu0 0.0
        %1350 = vmatpush1.msra.mxu0 0.0
        %1351 = vmatprep.subr.mxu0 0.0
        %1352 = vmatpush1.msra.mxu0 0.0
        %1353 = vmatprep.subr.mxu0 0.0
        %1354 = vmatpush1.msra.mxu0 0.0
        %1355 = vmatprep.subr.mxu0 0.0
        %1356 = vmatpush1.msra.mxu0 0.0
        %1357 = vmatprep.subr.mxu0 0.0
        %1358 = vmatpush1.msra.mxu0 0.0
        %1359 = vmatprep.subr.mxu0 0.0
        %1360 = vmatpush1.msra.mxu0 0.0
        %1361 = vmatprep.subr.mxu0 0.0
        %1362 = vmatpush1.msra.mxu0 0.0
        %1363 = vmatprep.subr.mxu0 0.0
        %1364 = vmatpush1.msra.mxu0 0.0
        %1365 = vmatprep.subr.mxu0 0.0
        %1366 = vmatpush1.msra.mxu0 0.0
        %1367 = vmatprep.subr.mxu0 0.0
        %1368 = vmatpush1.msra.mxu0 0.0
        %1369 = vmatprep.subr.mxu0 0.0
        %1370 = vmatpush1.msra.mxu0 0.0
        %1371 = vmatprep.mubr.f32.mxu0 0.0
        %1372 = vmatmul.mubr.f32.gmra.mrb[0].mxu0 %v1305
        %v1373 = vpop.f32.mrb[0].mxu0
        %v1374 = vadd.f32 0.0, %v1373
        %v1375 = vpop.f32.mrb[0].mxu0
        %1376 = vdwg.mxu0
        %1377 = vrot.lane.b32.xlu0 %v299, 96
        %v1378 = vpop.permute.xlu0 %1377
        %v1381 = vsel %vm460, %v1300, 0
        %1383 = vmatprep.subr.mxu0 0.0
        %1384 = vmatpush1.msra.mxu0 %v1378
        %1385 = vmatprep.subr.mxu0 0.0
        %1386 = vmatpush1.msra.mxu0 0.0
        %1387 = vmatprep.subr.mxu0 0.0
        %1388 = vmatpush1.msra.mxu0 0.0
        %1389 = vmatprep.subr.mxu0 0.0
        %1390 = vmatpush1.msra.mxu0 0.0
        %1391 = vmatprep.subr.mxu0 0.0
        %1392 = vmatpush1.msra.mxu0 0.0
        %1393 = vmatprep.subr.mxu0 0.0
        %1394 = vmatpush1.msra.mxu0 0.0
        %1395 = vmatprep.subr.mxu0 0.0
        %1396 = vmatpush1.msra.mxu0 0.0
        %1397 = vmatprep.subr.mxu0 0.0
        %1398 = vmatpush1.msra.mxu0 0.0
        %1399 = vmatprep.subr.mxu0 0.0
        %1400 = vmatpush1.msra.mxu0 0.0
        %1401 = vmatprep.subr.mxu0 0.0
        %1402 = vmatpush1.msra.mxu0 0.0
        %1403 = vmatprep.subr.mxu0 0.0
        %1404 = vmatpush1.msra.mxu0 0.0
        %1405 = vmatprep.subr.mxu0 0.0
        %1406 = vmatpush1.msra.mxu0 0.0
        %1407 = vmatprep.subr.mxu0 0.0
        %1408 = vmatpush1.msra.mxu0 0.0
        %1409 = vmatprep.subr.mxu0 0.0
        %1410 = vmatpush1.msra.mxu0 0.0
        %1411 = vmatprep.subr.mxu0 0.0
        %1412 = vmatpush1.msra.mxu0 0.0
        %1413 = vmatprep.subr.mxu0 0.0
        %1414 = vmatpush1.msra.mxu0 0.0
        %1415 = vmatprep.subr.mxu0 0.0
        %1416 = vmatpush1.msra.mxu0 0.0
        %1417 = vmatprep.subr.mxu0 0.0
        %1418 = vmatpush1.msra.mxu0 0.0
        %1419 = vmatprep.subr.mxu0 0.0
        %1420 = vmatpush1.msra.mxu0 0.0
        %1421 = vmatprep.subr.mxu0 0.0
        %1422 = vmatpush1.msra.mxu0 0.0
        %1423 = vmatprep.subr.mxu0 0.0
        %1424 = vmatpush1.msra.mxu0 0.0
        %1425 = vmatprep.subr.mxu0 0.0
        %1426 = vmatpush1.msra.mxu0 0.0
        %1427 = vmatprep.subr.mxu0 0.0
        %1428 = vmatpush1.msra.mxu0 0.0
        %1429 = vmatprep.subr.mxu0 0.0
        %1430 = vmatpush1.msra.mxu0 0.0
        %1431 = vmatprep.subr.mxu0 0.0
        %1432 = vmatpush1.msra.mxu0 0.0
        %1433 = vmatprep.subr.mxu0 0.0
        %1434 = vmatpush1.msra.mxu0 0.0
        %1435 = vmatprep.subr.mxu0 0.0
        %1436 = vmatpush1.msra.mxu0 0.0
        %1437 = vmatprep.subr.mxu0 0.0
        %1438 = vmatpush1.msra.mxu0 0.0
        %1439 = vmatprep.subr.mxu0 0.0
        %1440 = vmatpush1.msra.mxu0 0.0
        %1441 = vmatprep.subr.mxu0 0.0
        %1442 = vmatpush1.msra.mxu0 0.0
        %1443 = vmatprep.subr.mxu0 0.0
        %1444 = vmatpush1.msra.mxu0 0.0
        %1445 = vmatprep.subr.mxu0 0.0
        %1446 = vmatpush1.msra.mxu0 0.0
        %1447 = vmatprep.mubr.f32.mxu0 0.0
        %1448 = vmatmul.mubr.f32.gmra.mrb[0].mxu0 %v1381
        %v1449 = vpop.f32.mrb[0].mxu0
        %v1450 = vadd.f32 0.0, %v1449
        %v1451 = vpop.f32.mrb[0].mxu0
        %1452 = vdwg.mxu0
        %v1454 = vsel %vm306, %v1374, 0
        %v1457 = vsel %vm306, %v1450, 0
        %1459 = vmatprep.subr.mxu0 0.0
        %1460 = vmatpush1.msra.mxu0 %v213
        %1461 = vmatprep.subr.mxu0 0.0
        %1462 = vmatpush1.msra.mxu0 %v214
        %1463 = vmatprep.subr.mxu0 0.0
        %1464 = vmatpush1.msra.mxu0 0.0
        %1465 = vmatprep.subr.mxu0 0.0
        %1466 = vmatpush1.msra.mxu0 0.0
        %1467 = vmatprep.subr.mxu0 0.0
        %1468 = vmatpush1.msra.mxu0 0.0
        %1469 = vmatprep.subr.mxu0 0.0
        %1470 = vmatpush1.msra.mxu0 0.0
        %1471 = vmatprep.subr.mxu0 0.0
        %1472 = vmatpush1.msra.mxu0 0.0
        %1473 = vmatprep.subr.mxu0 0.0
        %1474 = vmatpush1.msra.mxu0 0.0
        %1475 = vmatprep.subr.mxu0 0.0
        %1476 = vmatpush1.msra.mxu0 0.0
        %1477 = vmatprep.subr.mxu0 0.0
        %1478 = vmatpush1.msra.mxu0 0.0
        %1479 = vmatprep.subr.mxu0 0.0
        %1480 = vmatpush1.msra.mxu0 0.0
        %1481 = vmatprep.subr.mxu0 0.0
        %1482 = vmatpush1.msra.mxu0 0.0
        %1483 = vmatprep.subr.mxu0 0.0
        %1484 = vmatpush1.msra.mxu0 0.0
        %1485 = vmatprep.subr.mxu0 0.0
        %1486 = vmatpush1.msra.mxu0 0.0
        %1487 = vmatprep.subr.mxu0 0.0
        %1488 = vmatpush1.msra.mxu0 0.0
        %1489 = vmatprep.subr.mxu0 0.0
        %1490 = vmatpush1.msra.mxu0 0.0
        %1491 = vmatprep.subr.mxu0 0.0
        %1492 = vmatpush1.msra.mxu0 0.0
        %1493 = vmatprep.subr.mxu0 0.0
        %1494 = vmatpush1.msra.mxu0 0.0
        %1495 = vmatprep.subr.mxu0 0.0
        %1496 = vmatpush1.msra.mxu0 0.0
        %1497 = vmatprep.subr.mxu0 0.0
        %1498 = vmatpush1.msra.mxu0 0.0
        %1499 = vmatprep.subr.mxu0 0.0
        %1500 = vmatpush1.msra.mxu0 0.0
        %1501 = vmatprep.subr.mxu0 0.0
        %1502 = vmatpush1.msra.mxu0 0.0
        %1503 = vmatprep.subr.mxu0 0.0
        %1504 = vmatpush1.msra.mxu0 0.0
        %1505 = vmatprep.subr.mxu0 0.0
        %1506 = vmatpush1.msra.mxu0 0.0
        %1507 = vmatprep.subr.mxu0 0.0
        %1508 = vmatpush1.msra.mxu0 0.0
        %1509 = vmatprep.subr.mxu0 0.0
        %1510 = vmatpush1.msra.mxu0 0.0
        %1511 = vmatprep.subr.mxu0 0.0
        %1512 = vmatpush1.msra.mxu0 0.0
        %1513 = vmatprep.subr.mxu0 0.0
        %1514 = vmatpush1.msra.mxu0 0.0
        %1515 = vmatprep.subr.mxu0 0.0
        %1516 = vmatpush1.msra.mxu0 0.0
        %1517 = vmatprep.subr.mxu0 0.0
        %1518 = vmatpush1.msra.mxu0 0.0
        %1519 = vmatprep.subr.mxu0 0.0
        %1520 = vmatpush1.msra.mxu0 0.0
        %1521 = vmatprep.subr.mxu0 0.0
        %1522 = vmatpush1.msra.mxu0 0.0
        %1523 = vmatprep.mubr.f32.mxu0 0.0
        %1524 = vmatmul.mubr.f32.gmra.mrb[0].mxu0 %v1454
        %v1525 = vpop.f32.mrb[0].mxu0
        %v1526 = vadd.f32 0.0, %v1525
        %v1527 = vpop.f32.mrb[0].mxu0
        %1528 = vmatprep.mubr.f32.mxu0 0.0
        %1529 = vmatmul.mubr.f32.gmra.mrb[0].mxu0 %v1457
        %v1530 = vpop.f32.mrb[0].mxu0
        %v1531 = vadd.f32 0.0, %v1530
        %v1532 = vpop.f32.mrb[0].mxu0
        %1533 = vdwg.mxu0
        %v1534 = vadd.f32 %v1115, %v1526
        %v1535 = vadd.f32 %v1120, %v1531
        %1536 = vrot.lane.b32.xlu0 %v301, 80
        %v1537 = vpop.permute.xlu0 %1536
        %1538 = vrot.lane.b32.xlu0 %v291, 16
        %v1539 = vpop.permute.xlu0 %1538
        %v1540 = vsel %vm306, %v1537, 0
        %v1542 = vsel %vm306, %v1539, 0
        %1544 = vmatprep.subr.mxu0 0.0
        %1545 = vmatpush1.xpose.msra.mxu0 %v1542
        %1546 = vmatprep.subr.mxu0 0.0
        %1547 = vmatpush1.xpose.msra.mxu0 0.0
        %1548 = vmatprep.subr.mxu0 0.0
        %1549 = vmatpush1.xpose.msra.mxu0 0.0
        %1550 = vmatprep.subr.mxu0 0.0
        %1551 = vmatpush1.xpose.msra.mxu0 0.0
        %1552 = vmatprep.subr.mxu0 0.0
        %1553 = vmatpush1.xpose.msra.mxu0 0.0
        %1554 = vmatprep.subr.mxu0 0.0
        %1555 = vmatpush1.xpose.msra.mxu0 0.0
        %1556 = vmatprep.subr.mxu0 0.0
        %1557 = vmatpush1.xpose.msra.mxu0 0.0
        %1558 = vmatprep.subr.mxu0 0.0
        %1559 = vmatpush1.xpose.msra.mxu0 0.0
        %1560 = vmatprep.subr.mxu0 0.0
        %1561 = vmatpush1.xpose.msra.mxu0 0.0
        %1562 = vmatprep.subr.mxu0 0.0
        %1563 = vmatpush1.xpose.msra.mxu0 0.0
        %1564 = vmatprep.subr.mxu0 0.0
        %1565 = vmatpush1.xpose.msra.mxu0 0.0
        %1566 = vmatprep.subr.mxu0 0.0
        %1567 = vmatpush1.xpose.msra.mxu0 0.0
        %1568 = vmatprep.subr.mxu0 0.0
        %1569 = vmatpush1.xpose.msra.mxu0 0.0
        %1570 = vmatprep.subr.mxu0 0.0
        %1571 = vmatpush1.xpose.msra.mxu0 0.0
        %1572 = vmatprep.subr.mxu0 0.0
        %1573 = vmatpush1.xpose.msra.mxu0 0.0
        %1574 = vmatprep.subr.mxu0 0.0
        %1575 = vmatpush1.xpose.msra.mxu0 0.0
        %1576 = vmatprep.subr.mxu0 0.0
        %1577 = vmatpush1.xpose.msra.mxu0 0.0
        %1578 = vmatprep.subr.mxu0 0.0
        %1579 = vmatpush1.xpose.msra.mxu0 0.0
        %1580 = vmatprep.subr.mxu0 0.0
        %1581 = vmatpush1.xpose.msra.mxu0 0.0
        %1582 = vmatprep.subr.mxu0 0.0
        %1583 = vmatpush1.xpose.msra.mxu0 0.0
        %1584 = vmatprep.subr.mxu0 0.0
        %1585 = vmatpush1.xpose.msra.mxu0 0.0
        %1586 = vmatprep.subr.mxu0 0.0
        %1587 = vmatpush1.xpose.msra.mxu0 0.0
        %1588 = vmatprep.subr.mxu0 0.0
        %1589 = vmatpush1.xpose.msra.mxu0 0.0
        %1590 = vmatprep.subr.mxu0 0.0
        %1591 = vmatpush1.xpose.msra.mxu0 0.0
        %1592 = vmatprep.subr.mxu0 0.0
        %1593 = vmatpush1.xpose.msra.mxu0 0.0
        %1594 = vmatprep.subr.mxu0 0.0
        %1595 = vmatpush1.xpose.msra.mxu0 0.0
        %1596 = vmatprep.subr.mxu0 0.0
        %1597 = vmatpush1.xpose.msra.mxu0 0.0
        %1598 = vmatprep.subr.mxu0 0.0
        %1599 = vmatpush1.xpose.msra.mxu0 0.0
        %1600 = vmatprep.subr.mxu0 0.0
        %1601 = vmatpush1.xpose.msra.mxu0 0.0
        %1602 = vmatprep.subr.mxu0 0.0
        %1603 = vmatpush1.xpose.msra.mxu0 0.0
        %1604 = vmatprep.subr.mxu0 0.0
        %1605 = vmatpush1.xpose.msra.mxu0 0.0
        %1606 = vmatprep.subr.mxu0 0.0
        %1607 = vmatpush1.xpose.msra.mxu0 0.0
        %1608 = vmatprep.mubr.f32.mxu0 0.0
        %1609 = vmatmul.mubr.f32.gmra.mrb[0].mxu0 %v1540
        %v1610 = vpop.f32.mrb[0].mxu0
        %v1611 = vadd.f32 0.0, %v1610
        %v1612 = vpop.f32.mrb[0].mxu0
        %1613 = vdwg.mxu0
        %1614 = vrot.lane.b32.xlu0 %v302, 80
        %v1615 = vpop.permute.xlu0 %1614
        %1616 = vrot.lane.b32.xlu0 %v297, 16
        %v1617 = vpop.permute.xlu0 %1616
        %v1618 = vsel %vm306, %v1615, 0
        %v1620 = vsel %vm306, %v1617, 0
        %1622 = vmatprep.subr.mxu0 0.0
        %1623 = vmatpush1.xpose.msra.mxu0 %v1620
        %1624 = vmatprep.subr.mxu0 0.0
        %1625 = vmatpush1.xpose.msra.mxu0 0.0
        %1626 = vmatprep.subr.mxu0 0.0
        %1627 = vmatpush1.xpose.msra.mxu0 0.0
        %1628 = vmatprep.subr.mxu0 0.0
        %1629 = vmatpush1.xpose.msra.mxu0 0.0
        %1630 = vmatprep.subr.mxu0 0.0
        %1631 = vmatpush1.xpose.msra.mxu0 0.0
        %1632 = vmatprep.subr.mxu0 0.0
        %1633 = vmatpush1.xpose.msra.mxu0 0.0
        %1634 = vmatprep.subr.mxu0 0.0
        %1635 = vmatpush1.xpose.msra.mxu0 0.0
        %1636 = vmatprep.subr.mxu0 0.0
        %1637 = vmatpush1.xpose.msra.mxu0 0.0
        %1638 = vmatprep.subr.mxu0 0.0
        %1639 = vmatpush1.xpose.msra.mxu0 0.0
        %1640 = vmatprep.subr.mxu0 0.0
        %1641 = vmatpush1.xpose.msra.mxu0 0.0
        %1642 = vmatprep.subr.mxu0 0.0
        %1643 = vmatpush1.xpose.msra.mxu0 0.0
        %1644 = vmatprep.subr.mxu0 0.0
        %1645 = vmatpush1.xpose.msra.mxu0 0.0
        %1646 = vmatprep.subr.mxu0 0.0
        %1647 = vmatpush1.xpose.msra.mxu0 0.0
        %1648 = vmatprep.subr.mxu0 0.0
        %1649 = vmatpush1.xpose.msra.mxu0 0.0
        %1650 = vmatprep.subr.mxu0 0.0
        %1651 = vmatpush1.xpose.msra.mxu0 0.0
        %1652 = vmatprep.subr.mxu0 0.0
        %1653 = vmatpush1.xpose.msra.mxu0 0.0
        %1654 = vmatprep.subr.mxu0 0.0
        %1655 = vmatpush1.xpose.msra.mxu0 0.0
        %1656 = vmatprep.subr.mxu0 0.0
        %1657 = vmatpush1.xpose.msra.mxu0 0.0
        %1658 = vmatprep.subr.mxu0 0.0
        %1659 = vmatpush1.xpose.msra.mxu0 0.0
        %1660 = vmatprep.subr.mxu0 0.0
        %1661 = vmatpush1.xpose.msra.mxu0 0.0
        %1662 = vmatprep.subr.mxu0 0.0
        %1663 = vmatpush1.xpose.msra.mxu0 0.0
        %1664 = vmatprep.subr.mxu0 0.0
        %1665 = vmatpush1.xpose.msra.mxu0 0.0
        %1666 = vmatprep.subr.mxu0 0.0
        %1667 = vmatpush1.xpose.msra.mxu0 0.0
        %1668 = vmatprep.subr.mxu0 0.0
        %1669 = vmatpush1.xpose.msra.mxu0 0.0
        %1670 = vmatprep.subr.mxu0 0.0
        %1671 = vmatpush1.xpose.msra.mxu0 0.0
        %1672 = vmatprep.subr.mxu0 0.0
        %1673 = vmatpush1.xpose.msra.mxu0 0.0
        %1674 = vmatprep.subr.mxu0 0.0
        %1675 = vmatpush1.xpose.msra.mxu0 0.0
        %1676 = vmatprep.subr.mxu0 0.0
        %1677 = vmatpush1.xpose.msra.mxu0 0.0
        %1678 = vmatprep.subr.mxu0 0.0
        %1679 = vmatpush1.xpose.msra.mxu0 0.0
        %1680 = vmatprep.subr.mxu0 0.0
        %1681 = vmatpush1.xpose.msra.mxu0 0.0
        %1682 = vmatprep.subr.mxu0 0.0
        %1683 = vmatpush1.xpose.msra.mxu0 0.0
        %1684 = vmatprep.subr.mxu0 0.0
        %1685 = vmatpush1.xpose.msra.mxu0 0.0
        %1686 = vmatprep.mubr.f32.mxu0 0.0
        %1687 = vmatmul.mubr.f32.gmra.mrb[0].mxu0 %v1618
        %v1688 = vpop.f32.mrb[0].mxu0
        %v1689 = vadd.f32 0.0, %v1688
        %v1690 = vpop.f32.mrb[0].mxu0
        %1691 = vdwg.mxu0
        %v1692 = vsel %vm460, %v1611, -inf
        %1693 = vmax.xlane.f32.xlu0 %v1692
        %v1694 = vpop.xlane.xlu0 %1693
        %v1695 = vsel %vm460, %v1689, -inf
        %1696 = vmax.xlane.f32.xlu0 %v1695
        %v1697 = vpop.xlane.xlu0 %1696
        %v1698 = vsub.f32 %v1611, %v1694
        %v1699 = vsub.f32 %v1689, %v1697
        %v1700 = vmul.f32 %v1698, 1.442695
        %v1701 = vpow.pop %v1700
        %v1702 = vmul.f32 %v1699, 1.442695
        %v1703 = vpow.pop %v1702
        %v1704 = vsel %vm460, %v1701, 0.0
        %1705 = vadd.xlane.f32.xlu0 %v1704
        %v1706 = vpop.xlane.xlu0 %1705
        %v1707 = vsel %vm460, %v1703, 0.0
        %1708 = vadd.xlane.f32.xlu0 %v1707
        %v1709 = vpop.xlane.xlu0 %1708
        %v1710 = vrcp.pop %v1706
        %v1711 = vrcp.pop %v1709
        %v1712 = vmul.f32 %v1701, %v1710
        %v1713 = vmul.f32 %v1703, %v1711
        %1714 = vrot.lane.b32.xlu0 %v293, 80
        %v1715 = vpop.permute.xlu0 %1714
        %v1718 = vsel %vm460, %v1712, 0
        %1720 = vmatprep.subr.mxu0 0.0
        %1721 = vmatpush1.msra.mxu0 %v1715
        %1722 = vmatprep.subr.mxu0 0.0
        %1723 = vmatpush1.msra.mxu0 0.0
        %1724 = vmatprep.subr.mxu0 0.0
        %1725 = vmatpush1.msra.mxu0 0.0
        %1726 = vmatprep.subr.mxu0 0.0
        %1727 = vmatpush1.msra.mxu0 0.0
        %1728 = vmatprep.subr.mxu0 0.0
        %1729 = vmatpush1.msra.mxu0 0.0
        %1730 = vmatprep.subr.mxu0 0.0
        %1731 = vmatpush1.msra.mxu0 0.0
        %1732 = vmatprep.subr.mxu0 0.0
        %1733 = vmatpush1.msra.mxu0 0.0
        %1734 = vmatprep.subr.mxu0 0.0
        %1735 = vmatpush1.msra.mxu0 0.0
        %1736 = vmatprep.subr.mxu0 0.0
        %1737 = vmatpush1.msra.mxu0 0.0
        %1738 = vmatprep.subr.mxu0 0.0
        %1739 = vmatpush1.msra.mxu0 0.0
        %1740 = vmatprep.subr.mxu0 0.0
        %1741 = vmatpush1.msra.mxu0 0.0
        %1742 = vmatprep.subr.mxu0 0.0
        %1743 = vmatpush1.msra.mxu0 0.0
        %1744 = vmatprep.subr.mxu0 0.0
        %1745 = vmatpush1.msra.mxu0 0.0
        %1746 = vmatprep.subr.mxu0 0.0
        %1747 = vmatpush1.msra.mxu0 0.0
        %1748 = vmatprep.subr.mxu0 0.0
        %1749 = vmatpush1.msra.mxu0 0.0
        %1750 = vmatprep.subr.mxu0 0.0
        %1751 = vmatpush1.msra.mxu0 0.0
        %1752 = vmatprep.subr.mxu0 0.0
        %1753 = vmatpush1.msra.mxu0 0.0
        %1754 = vmatprep.subr.mxu0 0.0
        %1755 = vmatpush1.msra.mxu0 0.0
        %1756 = vmatprep.subr.mxu0 0.0
        %1757 = vmatpush1.msra.mxu0 0.0
        %1758 = vmatprep.subr.mxu0 0.0
        %1759 = vmatpush1.msra.mxu0 0.0
        %1760 = vmatprep.subr.mxu0 0.0
        %1761 = vmatpush1.msra.mxu0 0.0
        %1762 = vmatprep.subr.mxu0 0.0
        %1763 = vmatpush1.msra.mxu0 0.0
        %1764 = vmatprep.subr.mxu0 0.0
        %1765 = vmatpush1.msra.mxu0 0.0
        %1766 = vmatprep.subr.mxu0 0.0
        %1767 = vmatpush1.msra.mxu0 0.0
        %1768 = vmatprep.subr.mxu0 0.0
        %1769 = vmatpush1.msra.mxu0 0.0
        %1770 = vmatprep.subr.mxu0 0.0
        %1771 = vmatpush1.msra.mxu0 0.0
        %1772 = vmatprep.subr.mxu0 0.0
        %1773 = vmatpush1.msra.mxu0 0.0
        %1774 = vmatprep.subr.mxu0 0.0
        %1775 = vmatpush1.msra.mxu0 0.0
        %1776 = vmatprep.subr.mxu0 0.0
        %1777 = vmatpush1.msra.mxu0 0.0
        %1778 = vmatprep.subr.mxu0 0.0
        %1779 = vmatpush1.msra.mxu0 0.0
        %1780 = vmatprep.subr.mxu0 0.0
        %1781 = vmatpush1.msra.mxu0 0.0
        %1782 = vmatprep.subr.mxu0 0.0
        %1783 = vmatpush1.msra.mxu0 0.0
        %1784 = vmatprep.mubr.f32.mxu0 0.0
        %1785 = vmatmul.mubr.f32.gmra.mrb[0].mxu0 %v1718
        %v1786 = vpop.f32.mrb[0].mxu0
        %v1787 = vadd.f32 0.0, %v1786
        %v1788 = vpop.f32.mrb[0].mxu0
        %1789 = vdwg.mxu0
        %1790 = vrot.lane.b32.xlu0 %v299, 80
        %v1791 = vpop.permute.xlu0 %1790
        %v1794 = vsel %vm460, %v1713, 0
        %1796 = vmatprep.subr.mxu0 0.0
        %1797 = vmatpush1.msra.mxu0 %v1791
        %1798 = vmatprep.subr.mxu0 0.0
        %1799 = vmatpush1.msra.mxu0 0.0
        %1800 = vmatprep.subr.mxu0 0.0
        %1801 = vmatpush1.msra.mxu0 0.0
        %1802 = vmatprep.subr.mxu0 0.0
        %1803 = vmatpush1.msra.mxu0 0.0
        %1804 = vmatprep.subr.mxu0 0.0
        %1805 = vmatpush1.msra.mxu0 0.0
        %1806 = vmatprep.subr.mxu0 0.0
        %1807 = vmatpush1.msra.mxu0 0.0
        %1808 = vmatprep.subr.mxu0 0.0
        %1809 = vmatpush1.msra.mxu0 0.0
        %1810 = vmatprep.subr.mxu0 0.0
        %1811 = vmatpush1.msra.mxu0 0.0
        %1812 = vmatprep.subr.mxu0 0.0
        %1813 = vmatpush1.msra.mxu0 0.0
        %1814 = vmatprep.subr.mxu0 0.0
        %1815 = vmatpush1.msra.mxu0 0.0
        %1816 = vmatprep.subr.mxu0 0.0
        %1817 = vmatpush1.msra.mxu0 0.0
        %1818 = vmatprep.subr.mxu0 0.0
        %1819 = vmatpush1.msra.mxu0 0.0
        %1820 = vmatprep.subr.mxu0 0.0
        %1821 = vmatpush1.msra.mxu0 0.0
        %1822 = vmatprep.subr.mxu0 0.0
        %1823 = vmatpush1.msra.mxu0 0.0
        %1824 = vmatprep.subr.mxu0 0.0
        %1825 = vmatpush1.msra.mxu0 0.0
        %1826 = vmatprep.subr.mxu0 0.0
        %1827 = vmatpush1.msra.mxu0 0.0
        %1828 = vmatprep.subr.mxu0 0.0
        %1829 = vmatpush1.msra.mxu0 0.0
        %1830 = vmatprep.subr.mxu0 0.0
        %1831 = vmatpush1.msra.mxu0 0.0
        %1832 = vmatprep.subr.mxu0 0.0
        %1833 = vmatpush1.msra.mxu0 0.0
        %1834 = vmatprep.subr.mxu0 0.0
        %1835 = vmatpush1.msra.mxu0 0.0
        %1836 = vmatprep.subr.mxu0 0.0
        %1837 = vmatpush1.msra.mxu0 0.0
        %1838 = vmatprep.subr.mxu0 0.0
        %1839 = vmatpush1.msra.mxu0 0.0
        %1840 = vmatprep.subr.mxu0 0.0
        %1841 = vmatpush1.msra.mxu0 0.0
        %1842 = vmatprep.subr.mxu0 0.0
        %1843 = vmatpush1.msra.mxu0 0.0
        %1844 = vmatprep.subr.mxu0 0.0
        %1845 = vmatpush1.msra.mxu0 0.0
        %1846 = vmatprep.subr.mxu0 0.0
        %1847 = vmatpush1.msra.mxu0 0.0
        %1848 = vmatprep.subr.mxu0 0.0
        %1849 = vmatpush1.msra.mxu0 0.0
        %1850 = vmatprep.subr.mxu0 0.0
        %1851 = vmatpush1.msra.mxu0 0.0
        %1852 = vmatprep.subr.mxu0 0.0
        %1853 = vmatpush1.msra.mxu0 0.0
        %1854 = vmatprep.subr.mxu0 0.0
        %1855 = vmatpush1.msra.mxu0 0.0
        %1856 = vmatprep.subr.mxu0 0.0
        %1857 = vmatpush1.msra.mxu0 0.0
        %1858 = vmatprep.subr.mxu0 0.0
        %1859 = vmatpush1.msra.mxu0 0.0
        %1860 = vmatprep.mubr.f32.mxu0 0.0
        %1861 = vmatmul.mubr.f32.gmra.mrb[0].mxu0 %v1794
        %v1862 = vpop.f32.mrb[0].mxu0
        %v1863 = vadd.f32 0.0, %v1862
        %v1864 = vpop.f32.mrb[0].mxu0
        %1865 = vdwg.mxu0
        %v1867 = vsel %vm306, %v1787, 0
        %v1870 = vsel %vm306, %v1863, 0
        %1872 = vmatprep.subr.mxu0 0.0
        %1873 = vmatpush1.msra.mxu0 %v215
        %1874 = vmatprep.subr.mxu0 0.0
        %1875 = vmatpush1.msra.mxu0 %v216
        %1876 = vmatprep.subr.mxu0 0.0
        %1877 = vmatpush1.msra.mxu0 0.0
        %1878 = vmatprep.subr.mxu0 0.0
        %1879 = vmatpush1.msra.mxu0 0.0
        %1880 = vmatprep.subr.mxu0 0.0
        %1881 = vmatpush1.msra.mxu0 0.0
        %1882 = vmatprep.subr.mxu0 0.0
        %1883 = vmatpush1.msra.mxu0 0.0
        %1884 = vmatprep.subr.mxu0 0.0
        %1885 = vmatpush1.msra.mxu0 0.0
        %1886 = vmatprep.subr.mxu0 0.0
        %1887 = vmatpush1.msra.mxu0 0.0
        %1888 = vmatprep.subr.mxu0 0.0
        %1889 = vmatpush1.msra.mxu0 0.0
        %1890 = vmatprep.subr.mxu0 0.0
        %1891 = vmatpush1.msra.mxu0 0.0
        %1892 = vmatprep.subr.mxu0 0.0
        %1893 = vmatpush1.msra.mxu0 0.0
        %1894 = vmatprep.subr.mxu0 0.0
        %1895 = vmatpush1.msra.mxu0 0.0
        %1896 = vmatprep.subr.mxu0 0.0
        %1897 = vmatpush1.msra.mxu0 0.0
        %1898 = vmatprep.subr.mxu0 0.0
        %1899 = vmatpush1.msra.mxu0 0.0
        %1900 = vmatprep.subr.mxu0 0.0
        %1901 = vmatpush1.msra.mxu0 0.0
        %1902 = vmatprep.subr.mxu0 0.0
        %1903 = vmatpush1.msra.mxu0 0.0
        %1904 = vmatprep.subr.mxu0 0.0
        %1905 = vmatpush1.msra.mxu0 0.0
        %1906 = vmatprep.subr.mxu0 0.0
        %1907 = vmatpush1.msra.mxu0 0.0
        %1908 = vmatprep.subr.mxu0 0.0
        %1909 = vmatpush1.msra.mxu0 0.0
        %1910 = vmatprep.subr.mxu0 0.0
        %1911 = vmatpush1.msra.mxu0 0.0
        %1912 = vmatprep.subr.mxu0 0.0
        %1913 = vmatpush1.msra.mxu0 0.0
        %1914 = vmatprep.subr.mxu0 0.0
        %1915 = vmatpush1.msra.mxu0 0.0
        %1916 = vmatprep.subr.mxu0 0.0
        %1917 = vmatpush1.msra.mxu0 0.0
        %1918 = vmatprep.subr.mxu0 0.0
        %1919 = vmatpush1.msra.mxu0 0.0
        %1920 = vmatprep.subr.mxu0 0.0
        %1921 = vmatpush1.msra.mxu0 0.0
        %1922 = vmatprep.subr.mxu0 0.0
        %1923 = vmatpush1.msra.mxu0 0.0
        %1924 = vmatprep.subr.mxu0 0.0
        %1925 = vmatpush1.msra.mxu0 0.0
        %1926 = vmatprep.subr.mxu0 0.0
        %1927 = vmatpush1.msra.mxu0 0.0
        %1928 = vmatprep.subr.mxu0 0.0
        %1929 = vmatpush1.msra.mxu0 0.0
        %1930 = vmatprep.subr.mxu0 0.0
        %1931 = vmatpush1.msra.mxu0 0.0
        %1932 = vmatprep.subr.mxu0 0.0
        %1933 = vmatpush1.msra.mxu0 0.0
        %1934 = vmatprep.subr.mxu0 0.0
        %1935 = vmatpush1.msra.mxu0 0.0
        %1936 = vmatprep.mubr.f32.mxu0 0.0
        %1937 = vmatmul.mubr.f32.gmra.mrb[0].mxu0 %v1867
        %v1938 = vpop.f32.mrb[0].mxu0
        %v1939 = vadd.f32 0.0, %v1938
        %v1940 = vpop.f32.mrb[0].mxu0
        %1941 = vmatprep.mubr.f32.mxu0 0.0
        %1942 = vmatmul.mubr.f32.gmra.mrb[0].mxu0 %v1870
        %v1943 = vpop.f32.mrb[0].mxu0
        %v1944 = vadd.f32 0.0, %v1943
        %v1945 = vpop.f32.mrb[0].mxu0
        %1946 = vdwg.mxu0
        %v1947 = vadd.f32 %v1534, %v1939
        %v1948 = vadd.f32 %v1535, %v1944
        %v1949 = vld [vmem:[%s3] sm:$0x1]
        %v1951 = vlaneseq
        %v1952 = vshrl.u32 %v1951, 7
        %v1953 = vsub.s32 0, %v1952
        %v1954 = vrot.slane %v1949, %v1953
        %v1956 = vadd.f32 %v1947, %v1954
        %v1957 = vadd.f32 %v1948, %v1954
        %1958 = vst.msk [vmem:[%s191] sm:$0xff] %vm217, %v1956
        %1959 = vst.msk [vmem:[%s191 + $0x8] sm:$0xff] %vm217, %v1957
        %s1960 = sand.u32 %s115, 1
        %s1961 = scalar_lea.sflag [#allocation3], %s1960
        %s1962 = sand.u32 %s115, 1
        %s1963 = smul.addr %s1962, 16
        %s1964 = scalar_lea.vmem [#allocation2], %s1963
        // Predicated region
        $region37: #{tpu_custom_call.1} parent=35 // pred_check
          %p1965 = pneg %p125
        $region38: #{tpu_custom_call.1} parent=35 // pred_check_branch
          %1967 = sbr.rel (%p1965) target = $region40
        $region39: #{tpu_custom_call.1} parent=35 // pred_region
          %s1968 = smul.u32 2, %s18
          %s1970 = ssub.s32 256, 256
          %1971 = vsyncadd %s1961, %s1970
          %s1972 = smul.addr %s1968, 128
          %s1973 = scalar_lea.hbm %s4, %s1972
          %s1974 = sshll.u32 %s1964, 4
          %s1975 = int_to_ptr.vmem [resolvable:$true] %s1974
          %1980 = dma.vmem_to_hbm [thread:$0]  %s1975, 256, %s1973, %s1961, 128, 128, 8
        $region40: #{tpu_custom_call.1} parent=35 // pred_fallthru
          _
      $region36: #{tpu_custom_call.1} parent=5 // pred_fallthru
        _
      %p1981 = scmp.le.s32.totalorder 2, %s13
      // Predicated region
      $region41: #{tpu_custom_call.1} parent=5 // pred_check
        %p1982 = pneg %p1981
      $region42: #{tpu_custom_call.1} parent=5 // pred_check_branch
        %1984 = sbr.rel (%p1982) target = $region44
      $region43: #{tpu_custom_call.1} parent=5 // pred_region
        %s1985 = ssub.s32 %s13, 2
        // Predicated region
        $region45: #{tpu_custom_call.1} parent=43 // pred_check
          %p1986 = pneg %p131
        $region46: #{tpu_custom_call.1} parent=43 // pred_check_branch
          %1988 = sbr.rel (%p1986) target = $region48
        $region47: #{tpu_custom_call.1} parent=43 // pred_region
          %s1989 = sand.u32 %s116, 1
          %s1990 = scalar_lea.sflag [#allocation3], %s1989
          %s1991 = sand.u32 %s116, 1
          %s1992 = smul.addr %s1991, 16
          %s1993 = scalar_lea.vmem [#allocation2], %s1992
          %1994 = dma.done %s1990, 256
        $region48: #{tpu_custom_call.1} parent=43 // pred_fallthru
          _
      $region44: #{tpu_custom_call.1} parent=5 // pred_fallthru
        _
    $region6: #{tpu_custom_call.1} parent=1 // loop_footer
      %s17 = sadd.s32 1, %s13
    $region7: #{tpu_custom_call.1} parent=1 // loop_footer_branch
      %12 = sbr.rel target = $region3
    $region8: #{tpu_custom_call.1} parent=1 // loop_exit
      _
    %1995 = vsyncpa [#allocation3], 1
    %s1996 = scalar_lea.sflag [#allocation3], 1
    %1997 = vsyncpa %s1996, 1

</llo_original>
